<compile_context>
chip_gen: v6e
topology: v6e:2x2x1
jax: 0.10.0
libtpu: 0.0.40
codegen_flags: <defaults>
</compile_context>

<pallas_src>
import functools

import jax
import jax.numpy as jnp
from jax.experimental import pallas as pl
from jax.experimental.pallas import tpu as pltpu


_VMEM_LIMIT_BYTES = 48 * 1024 * 1024   # headroom under v7x's 64 MiB per-TC VMEM
_FUSED_VMEM_BUDGET = 44 * 1024 * 1024  # conservative estimate gate for the fused path


def _round_up(v, m):
    return (v + m - 1) // m * m


def _pad2(a, rows, cols):
    return jnp.pad(a, ((0, rows - a.shape[0]), (0, cols - a.shape[1])))


# ---------------------------------------------------------------------------
# Path A: fully fused forward (adj resident in VMEM across all three layers)
# ---------------------------------------------------------------------------
def _fused_gcn_kernel(x_ref, adj_ref, w1_ref, b1_ref, w2_ref, b2_ref,
                      w3_ref, b3_ref, out_ref):
    adj = adj_ref[...]
    cd = adj.dtype

    def layer(h, w_ref, b_ref, relu):
        # T = H @ W + b (f32 accumulate), then propagate: adj @ T.
        t = (jnp.dot(h, w_ref[...], preferred_element_type=jnp.float32)
             + b_ref[...]).astype(cd)
        y = jnp.dot(adj, t, preferred_element_type=jnp.float32)
        return jnp.maximum(y, 0.0) if relu else y

    h = layer(x_ref[...], w1_ref, b1_ref, True).astype(cd)
    h = layer(h, w2_ref, b2_ref, True).astype(cd)
    out_ref[...] = layer(h, w3_ref, b3_ref, False)   # f32 logits


def _fused_forward(x_p, adj_p, w1_p, b1_p, w2_p, b2_p, w3_p, b3_p):
    n_pad, f_pad = x_p.shape
    d1, d2, c_pad = w1_p.shape[1], w2_p.shape[1], w3_p.shape[1]

    def fs(shape):
        nd = len(shape)
        return pl.BlockSpec(shape, lambda i, _nd=nd: (0,) * _nd)

    flops = 2 * n_pad * (f_pad * d1 + n_pad * d1 + d1 * d2 + n_pad * d2
                         + d2 * c_pad + n_pad * c_pad)
    bytes_accessed = int(
        x_p.size * x_p.dtype.itemsize + adj_p.size * adj_p.dtype.itemsize
        + sum(a.size * a.dtype.itemsize
              for a in (w1_p, b1_p, w2_p, b2_p, w3_p, b3_p))
        + n_pad * c_pad * 4)

    return pl.pallas_call(
        _fused_gcn_kernel,
        out_shape=jax.ShapeDtypeStruct((n_pad, c_pad), jnp.float32),
        grid_spec=pltpu.PrefetchScalarGridSpec(
            num_scalar_prefetch=0,
            grid=(1,),
            in_specs=[fs(x_p.shape), fs(adj_p.shape),
                      fs(w1_p.shape), fs(b1_p.shape),
                      fs(w2_p.shape), fs(b2_p.shape),
                      fs(w3_p.shape), fs(b3_p.shape)],
            out_specs=fs((n_pad, c_pad)),
        ),
        compiler_params=pltpu.CompilerParams(
            dimension_semantics=("arbitrary",),
            vmem_limit_bytes=_VMEM_LIMIT_BYTES),
        cost_estimate=pl.CostEstimate(flops=int(flops), transcendentals=0,
                                      bytes_accessed=bytes_accessed),
    )(x_p, adj_p, w1_p, b1_p, w2_p, b2_p, w3_p, b3_p)


def _fused_vmem_estimate(n_pad, f_pad, d1, d2, c_pad, in_itemsize):
    adj_b = n_pad * n_pad * in_itemsize
    x_b = n_pad * f_pad * in_itemsize
    w_b = (f_pad * d1 + d1 * d2 + d2 * c_pad) * in_itemsize + (d1 + d2 + c_pad) * 4
    out_b = n_pad * c_pad * 4
    inter_b = 4 * n_pad * max(d1, d2, c_pad) * 4      # T/H temporaries (f32)
    return 2 * (adj_b + x_b + w_b + out_b) + inter_b  # 2x: double-buffering


# ---------------------------------------------------------------------------
# Path B (large-graph fallback)
# Kernel B1: row-tiled feature transform  T = X @ W + b   (small, once/layer)
# ---------------------------------------------------------------------------
def _linear_kernel(x_ref, w_ref, b_ref, out_ref):
    acc = jnp.dot(x_ref[...], w_ref[...], preferred_element_type=jnp.float32)
    out_ref[...] = (acc + b_ref[...]).astype(out_ref.dtype)


def _linear(x, w, b, *, out_dtype, tile_m):
    n_p, f_in = x.shape
    f_out = w.shape[1]
    flops = 2 * n_p * f_in * f_out
    bytes_accessed = int(x.size * x.dtype.itemsize + w.size * w.dtype.itemsize
                         + b.size * b.dtype.itemsize
                         + n_p * f_out * jnp.dtype(out_dtype).itemsize)
    return pl.pallas_call(
        _linear_kernel,
        out_shape=jax.ShapeDtypeStruct((n_p, f_out), out_dtype),
        grid_spec=pltpu.PrefetchScalarGridSpec(
            num_scalar_prefetch=0,
            grid=(n_p // tile_m,),
            in_specs=[
                pl.BlockSpec((tile_m, f_in), lambda i: (i, 0)),
                pl.BlockSpec((f_in, f_out), lambda i: (0, 0)),
                pl.BlockSpec((1, f_out), lambda i: (0, 0)),
            ],
            out_specs=pl.BlockSpec((tile_m, f_out), lambda i: (i, 0)),
        ),
        compiler_params=pltpu.CompilerParams(
            dimension_semantics=("parallel",),
            vmem_limit_bytes=_VMEM_LIMIT_BYTES),
        cost_estimate=pl.CostEstimate(flops=int(flops), transcendentals=0,
                                      bytes_accessed=bytes_accessed),
    )(x, w, b)


# ---------------------------------------------------------------------------
# Kernel B2: row-strip propagation  Y = act(adj @ T), T fully VMEM-resident.
# 1-D grid: no k reduction axis, no accumulator, full-row contiguous adj DMAs.
# ---------------------------------------------------------------------------
def _propagate_kernel(adj_ref, t_ref, out_ref, *, apply_relu):
    y = jnp.dot(adj_ref[...], t_ref[...], preferred_element_type=jnp.float32)
    if apply_relu:
        y = jnp.maximum(y, 0.0)
    out_ref[...] = y.astype(out_ref.dtype)


def _propagate(adj, t, *, apply_relu, out_dtype, tile_m):
    n_p = adj.shape[0]
    f_out = t.shape[1]
    flops = 2 * n_p * n_p * f_out
    bytes_accessed = int(adj.size * adj.dtype.itemsize
                         + t.size * t.dtype.itemsize          # T read once (resident)
                         + n_p * f_out * jnp.dtype(out_dtype).itemsize)
    kernel = functools.partial(_propagate_kernel, apply_relu=apply_relu)
    return pl.pallas_call(
        kernel,
        out_shape=jax.ShapeDtypeStruct((n_p, f_out), out_dtype),
        grid_spec=pltpu.PrefetchScalarGridSpec(
            num_scalar_prefetch=0,
            grid=(n_p // tile_m,),
            in_specs=[
                pl.BlockSpec((tile_m, n_p), lambda i: (i, 0)),   # adj row strip
                pl.BlockSpec((n_p, f_out), lambda i: (0, 0)),    # T, VMEM-resident
            ],
            out_specs=pl.BlockSpec((tile_m, f_out), lambda i: (i, 0)),
        ),
        compiler_params=pltpu.CompilerParams(
            dimension_semantics=("parallel",),
            vmem_limit_bytes=_VMEM_LIMIT_BYTES),
        cost_estimate=pl.CostEstimate(flops=int(flops), transcendentals=0,
                                      bytes_accessed=bytes_accessed),
    )(adj, t)


def _pick_tile_m(n_pad, itemsize, strip_budget=8 * 1024 * 1024):
    # Largest 128-aligned tile that divides n_pad and keeps the double-buffered
    # adj row strip within a modest VMEM budget.
    for tm in (512, 256, 128):
        if n_pad % tm == 0 and 2 * tm * n_pad * itemsize <= strip_budget:
            return tm
    return 128


# ---------------------------------------------------------------------------
# Forward wrapper
# ---------------------------------------------------------------------------
def gcn_forward(x, adj, params, *, compute_dtype=jnp.bfloat16, force_tiled=False):
    """GCN forward. Returns int32 class indices of shape [N]."""
    w1, b1, w2, b2, w3, b3 = params
    n = x.shape[0]
    num_classes = w3.shape[1]

    # Pad N only to 128-alignment (adj traffic scales with n_pad^2).
    n_pad = _round_up(max(n, 128), 128)
    f_pad = _round_up(x.shape[1], 128)
    d1_pad = _round_up(w1.shape[1], 128)
    d2_pad = _round_up(w2.shape[1], 128)
    c_pad = _round_up(num_classes, 128)

    cd = jnp.dtype(compute_dtype)
    x_p = _pad2(x, n_pad, f_pad).astype(cd)
    adj_p = _pad2(adj, n_pad, n_pad).astype(cd)
    w1_p = _pad2(w1, f_pad, d1_pad).astype(cd)
    w2_p = _pad2(w2, d1_pad, d2_pad).astype(cd)
    w3_p = _pad2(w3, d2_pad, c_pad).astype(cd)
    b1_p = _pad2(b1.reshape(1, -1), 1, d1_pad).astype(jnp.float32)
    b2_p = _pad2(b2.reshape(1, -1), 1, d2_pad).astype(jnp.float32)
    b3_p = _pad2(b3.reshape(1, -1), 1, c_pad).astype(jnp.float32)

    est = _fused_vmem_estimate(n_pad, f_pad, d1_pad, d2_pad, c_pad, cd.itemsize)
    if (not force_tiled) and est <= _FUSED_VMEM_BUDGET:
        # Path A: adj resident on-chip, one launch, no intermediate HBM traffic.
        logits = _fused_forward(x_p, adj_p, w1_p, b1_p, w2_p, b2_p, w3_p, b3_p)
    else:
        # Path B: per-layer transform + row-strip propagation with resident T.
        tile_m = _pick_tile_m(n_pad, cd.itemsize)
        t = _linear(x_p, w1_p, b1_p, out_dtype=cd, tile_m=tile_m)
        h = _propagate(adj_p, t, apply_relu=True, out_dtype=cd, tile_m=tile_m)
        t = _linear(h, w2_p, b2_p, out_dtype=cd, tile_m=tile_m)
        h = _propagate(adj_p, t, apply_relu=True, out_dtype=cd, tile_m=tile_m)
        t = _linear(h, w3_p, b3_p, out_dtype=cd, tile_m=tile_m)
        logits = _propagate(adj_p, t, apply_relu=False, out_dtype=jnp.float32,
                            tile_m=tile_m)

    # argmax(log_softmax(z)) == argmax(z): softmax dropped, argmax in wrapper.
    return jnp.argmax(logits[:n, :num_classes], axis=1).astype(jnp.int32)


# ---------------------------------------------------------------------------
# Parameter init & pure-JAX reference
# ---------------------------------------------------------------------------
def xavier_uniform(key, fan_in, fan_out):
    bound = jnp.sqrt(6.0 / (fan_in + fan_out))
    return jax.random.uniform(key, (fan_in, fan_out), jnp.float32, -bound, bound)


def init_gcn_params(key, num_features, num_classes, hidden_dim=128,
                    bias_scale=0.0):
    # PyTorch module zero-inits biases; bias_scale > 0 is only used by the
    # self-test to exercise the bias path.
    k1, k2, k3, k4, k5, k6 = jax.random.split(key, 6)
    w1 = xavier_uniform(k1, num_features, hidden_dim)
    w2 = xavier_uniform(k2, hidden_dim, 64)
    w3 = xavier_uniform(k3, 64, num_classes)
    b1 = bias_scale * jax.random.normal(k4, (1, hidden_dim), jnp.float32)
    b2 = bias_scale * jax.random.normal(k5, (1, 64), jnp.float32)
    b3 = bias_scale * jax.random.normal(k6, (1, num_classes), jnp.float32)
    return (w1, b1, w2, b2, w3, b3)


def gcn_reference_logp(x, adj, params, compute_dtype=jnp.float32):
    """Pure-JAX reference mirroring the PyTorch forward (and the kernel dtype flow)."""
    w1, b1, w2, b2, w3, b3 = params
    cd = compute_dtype

    def lin(h, w, b):
        y = jnp.dot(h.astype(cd), w.astype(cd),
                    preferred_element_type=jnp.float32) + b.reshape(1, -1)
        return y.astype(cd)

    def prop(t, relu):
        y = jnp.dot(adj.astype(cd), t, preferred_element_type=jnp.float32)
        return jnp.maximum(y, 0.0).astype(cd) if relu else y

    h = prop(lin(x, w1, b1), True)
    h = prop(lin(h, w2, b2), True)
    logits = prop(lin(h, w3, b3), False)
    return jax.nn.log_softmax(logits, axis=1)


def _check_argmax(pred, ref_logp, tol):
    """Argmax must match the reference except on near-ties (margin <= tol)."""
    ref_pred = jnp.argmax(ref_logp, axis=1).astype(jnp.int32)
    mism = pred != ref_pred
    if bool(jnp.any(mism)):
        rows = jnp.nonzero(mism)[0]
        margin = ref_logp[rows, ref_pred[rows]] - ref_logp[rows, pred[rows]]
        assert bool(jnp.all(margin <= tol)), (rows, margin)


if __name__ == "__main__":
    # Small synthetic graph: N=200 nodes, 48 features, hidden=128 (module default),
    # 64-dim second layer (hardcoded in the module), 7 classes.
    N, F, C, HIDDEN = 200, 48, 7, 128
    key = jax.random.PRNGKey(0)
    kx, ka, kp = jax.random.split(key, 3)

    x = jax.random.normal(kx, (N, F), jnp.float32)

    # Dense symmetric adjacency with self loops, row-normalized (stands in for
    # the sparse adj of torch.sparse.mm).
    a = (jax.random.uniform(ka, (N, N)) < 0.05).astype(jnp.float32)
    a = jnp.maximum(a, a.T) + jnp.eye(N, dtype=jnp.float32)
    adj = a / jnp.sum(a, axis=1, keepdims=True)

    params = init_gcn_params(kp, num_features=F, num_classes=C,
                             hidden_dim=HIDDEN, bias_scale=0.1)

    ref_f32 = gcn_reference_logp(x, adj, params, jnp.float32)
    ref_bf16 = gcn_reference_logp(x, adj, params, jnp.bfloat16)

    # Fused path, f32: matches the f32 reference (up to accumulation-order ties).
    pred = jax.block_until_ready(
        gcn_forward(x, adj, params, compute_dtype=jnp.float32))
    assert pred.shape == (N,) and pred.dtype == jnp.int32
    _check_argmax(pred, ref_f32, tol=1e-3)

    # Fused path, bf16 (default): validated vs bf16-input / f32-accum reference.
    pred = jax.block_until_ready(gcn_forward(x, adj, params))
    assert pred.shape == (N,) and pred.dtype == jnp.int32
    _check_argmax(pred, ref_bf16, tol=1e-2)

    # Large-graph fallback path (forced), both dtypes, on the same small graph.
    pred = jax.block_until_ready(
        gcn_forward(x, adj, params, compute_dtype=jnp.float32, force_tiled=True))
    _check_argmax(pred, ref_f32, tol=1e-3)
    pred = jax.block_until_ready(gcn_forward(x, adj, params, force_tiled=True))
    _check_argmax(pred, ref_bf16, tol=1e-2)

    print("KERNEL_OK")
</pallas_src>

<mosaic_0001>
module attributes {stable_mosaic.version = 11 : i64} {
  func.func @_fused_gcn_kernel(%arg0: i32, %arg1: memref<256x128xf32, #tpu.memory_space<vmem>>, %arg2: memref<256x256xf32, #tpu.memory_space<vmem>>, %arg3: memref<128x128xf32, #tpu.memory_space<vmem>>, %arg4: memref<1x128xf32, #tpu.memory_space<vmem>>, %arg5: memref<128x128xf32, #tpu.memory_space<vmem>>, %arg6: memref<1x128xf32, #tpu.memory_space<vmem>>, %arg7: memref<128x128xf32, #tpu.memory_space<vmem>>, %arg8: memref<1x128xf32, #tpu.memory_space<vmem>>, %arg9: memref<256x128xf32, #tpu.memory_space<vmem>>) attributes {dimension_semantics = [#tpu.dimension_semantics<arbitrary>], iteration_bounds = array<i64: 1>, scalar_prefetch = 0 : i64, scratch_operands = 0 : i64, tpu.core_type = #tpu.core_type<tc>, window_params = [{pipeline_mode = #tpu.pipeline_mode<synchronous>, transform_indices = @transform_0, window_bounds = array<i64: 256, 128>}, {pipeline_mode = #tpu.pipeline_mode<synchronous>, transform_indices = @transform_1, window_bounds = array<i64: 256, 256>}, {pipeline_mode = #tpu.pipeline_mode<synchronous>, transform_indices = @transform_2, window_bounds = array<i64: 128, 128>}, {pipeline_mode = #tpu.pipeline_mode<synchronous>, transform_indices = @transform_3, window_bounds = array<i64: 1, 128>}, {pipeline_mode = #tpu.pipeline_mode<synchronous>, transform_indices = @transform_4, window_bounds = array<i64: 128, 128>}, {pipeline_mode = #tpu.pipeline_mode<synchronous>, transform_indices = @transform_5, window_bounds = array<i64: 1, 128>}, {pipeline_mode = #tpu.pipeline_mode<synchronous>, transform_indices = @transform_6, window_bounds = array<i64: 128, 128>}, {pipeline_mode = #tpu.pipeline_mode<synchronous>, transform_indices = @transform_7, window_bounds = array<i64: 1, 128>}, {pipeline_mode = #tpu.pipeline_mode<synchronous>, transform_indices = @transform_8, window_bounds = array<i64: 256, 128>}]} {
    %c0 = arith.constant 0 : index
    %c0_0 = arith.constant 0 : index
    %0 = vector.load %arg2[%c0, %c0_0] : memref<256x256xf32, #tpu.memory_space<vmem>>, vector<256x256xf32>
    %c0_1 = arith.constant 0 : index
    %c0_2 = arith.constant 0 : index
    %1 = vector.load %arg1[%c0_1, %c0_2] : memref<256x128xf32, #tpu.memory_space<vmem>>, vector<256x128xf32>
    %c0_3 = arith.constant 0 : index
    %c0_4 = arith.constant 0 : index
    %2 = vector.load %arg3[%c0_3, %c0_4] : memref<128x128xf32, #tpu.memory_space<vmem>>, vector<128x128xf32>
    %cst = arith.constant dense<0.000000e+00> : vector<256x128xf32>
    %3 = tpu.matmul %1, %2, %cst {dimension_numbers = #tpu.dot_dimension_numbers<[1], [0], [0], [1], [0, 0, 1, 1], [], []>} : vector<256x128xf32>, vector<128x128xf32>, vector<256x128xf32> -> vector<256x128xf32>
    %c0_5 = arith.constant 0 : index
    %c0_6 = arith.constant 0 : index
    %4 = vector.load %arg4[%c0_5, %c0_6] : memref<1x128xf32, #tpu.memory_space<vmem>>, vector<1x128xf32>
    %5 = vector.broadcast %4 : vector<1x128xf32> to vector<256x128xf32>
    %6 = arith.addf %3, %5 : vector<256x128xf32>
    %cst_7 = arith.constant dense<0.000000e+00> : vector<256x128xf32>
    %7 = tpu.matmul %0, %6, %cst_7 {dimension_numbers = #tpu.dot_dimension_numbers<[1], [0], [0], [1], [0, 0, 1, 1], [], []>} : vector<256x256xf32>, vector<256x128xf32>, vector<256x128xf32> -> vector<256x128xf32>
    %cst_8 = arith.constant 0.000000e+00 : f32
    %8 = vector.broadcast %cst_8 : f32 to vector<256x128xf32>
    %9 = arith.maximumf %7, %8 : vector<256x128xf32>
    %c0_9 = arith.constant 0 : index
    %c0_10 = arith.constant 0 : index
    %10 = vector.load %arg5[%c0_9, %c0_10] : memref<128x128xf32, #tpu.memory_space<vmem>>, vector<128x128xf32>
    %cst_11 = arith.constant dense<0.000000e+00> : vector<256x128xf32>
    %11 = tpu.matmul %9, %10, %cst_11 {dimension_numbers = #tpu.dot_dimension_numbers<[1], [0], [0], [1], [0, 0, 1, 1], [], []>} : vector<256x128xf32>, vector<128x128xf32>, vector<256x128xf32> -> vector<256x128xf32>
    %c0_12 = arith.constant 0 : index
    %c0_13 = arith.constant 0 : index
    %12 = vector.load %arg6[%c0_12, %c0_13] : memref<1x128xf32, #tpu.memory_space<vmem>>, vector<1x128xf32>
    %13 = vector.broadcast %12 : vector<1x128xf32> to vector<256x128xf32>
    %14 = arith.addf %11, %13 : vector<256x128xf32>
    %cst_14 = arith.constant dense<0.000000e+00> : vector<256x128xf32>
    %15 = tpu.matmul %0, %14, %cst_14 {dimension_numbers = #tpu.dot_dimension_numbers<[1], [0], [0], [1], [0, 0, 1, 1], [], []>} : vector<256x256xf32>, vector<256x128xf32>, vector<256x128xf32> -> vector<256x128xf32>
    %cst_15 = arith.constant 0.000000e+00 : f32
    %16 = vector.broadcast %cst_15 : f32 to vector<256x128xf32>
    %17 = arith.maximumf %15, %16 : vector<256x128xf32>
    %c0_16 = arith.constant 0 : index
    %c0_17 = arith.constant 0 : index
    %18 = vector.load %arg7[%c0_16, %c0_17] : memref<128x128xf32, #tpu.memory_space<vmem>>, vector<128x128xf32>
    %cst_18 = arith.constant dense<0.000000e+00> : vector<256x128xf32>
    %19 = tpu.matmul %17, %18, %cst_18 {dimension_numbers = #tpu.dot_dimension_numbers<[1], [0], [0], [1], [0, 0, 1, 1], [], []>} : vector<256x128xf32>, vector<128x128xf32>, vector<256x128xf32> -> vector<256x128xf32>
    %c0_19 = arith.constant 0 : index
    %c0_20 = arith.constant 0 : index
    %20 = vector.load %arg8[%c0_19, %c0_20] : memref<1x128xf32, #tpu.memory_space<vmem>>, vector<1x128xf32>
    %21 = vector.broadcast %20 : vector<1x128xf32> to vector<256x128xf32>
    %22 = arith.addf %19, %21 : vector<256x128xf32>
    %cst_21 = arith.constant dense<0.000000e+00> : vector<256x128xf32>
    %23 = tpu.matmul %0, %22, %cst_21 {dimension_numbers = #tpu.dot_dimension_numbers<[1], [0], [0], [1], [0, 0, 1, 1], [], []>} : vector<256x256xf32>, vector<256x128xf32>, vector<256x128xf32> -> vector<256x128xf32>
    %c0_22 = arith.constant 0 : index
    %c0_23 = arith.constant 0 : index
    %24 = vector.load %arg9[%c0_22, %c0_23] : memref<256x128xf32, #tpu.memory_space<vmem>>, vector<256x128xf32>
    tpu.vector_store %arg9[%c0_22, %c0_23], %23 {strides = array<i32>} : memref<256x128xf32, #tpu.memory_space<vmem>>, vector<256x128xf32>,
    return
  }
  func.func @transform_0(%arg0: i32) -> (i32, i32) {
    %c0_i32 = arith.constant 0 : i32
    %c0_i32_0 = arith.constant 0 : i32
    %c0_i32_1 = arith.constant 0 : i32
    return %c0_i32, %c0_i32_0 : i32, i32
  }
  func.func @transform_1(%arg0: i32) -> (i32, i32) {
    %c0_i32 = arith.constant 0 : i32
    %c0_i32_0 = arith.constant 0 : i32
    %c0_i32_1 = arith.constant 0 : i32
    return %c0_i32, %c0_i32_0 : i32, i32
  }
  func.func @transform_2(%arg0: i32) -> (i32, i32) {
    %c0_i32 = arith.constant 0 : i32
    %c0_i32_0 = arith.constant 0 : i32
    %c0_i32_1 = arith.constant 0 : i32
    return %c0_i32, %c0_i32_0 : i32, i32
  }
  func.func @transform_3(%arg0: i32) -> (i32, i32) {
    %c0_i32 = arith.constant 0 : i32
    %c0_i32_0 = arith.constant 0 : i32
    %c0_i32_1 = arith.constant 0 : i32
    return %c0_i32, %c0_i32_0 : i32, i32
  }
  func.func @transform_4(%arg0: i32) -> (i32, i32) {
    %c0_i32 = arith.constant 0 : i32
    %c0_i32_0 = arith.constant 0 : i32
    %c0_i32_1 = arith.constant 0 : i32
    return %c0_i32, %c0_i32_0 : i32, i32
  }
  func.func @transform_5(%arg0: i32) -> (i32, i32) {
    %c0_i32 = arith.constant 0 : i32
    %c0_i32_0 = arith.constant 0 : i32
    %c0_i32_1 = arith.constant 0 : i32
    return %c0_i32, %c0_i32_0 : i32, i32
  }
  func.func @transform_6(%arg0: i32) -> (i32, i32) {
    %c0_i32 = arith.constant 0 : i32
    %c0_i32_0 = arith.constant 0 : i32
    %c0_i32_1 = arith.constant 0 : i32
    return %c0_i32, %c0_i32_0 : i32, i32
  }
  func.func @transform_7(%arg0: i32) -> (i32, i32) {
    %c0_i32 = arith.constant 0 : i32
    %c0_i32_0 = arith.constant 0 : i32
    %c0_i32_1 = arith.constant 0 : i32
    return %c0_i32, %c0_i32_0 : i32, i32
  }
  func.func @transform_8(%arg0: i32) -> (i32, i32) {
    %c0_i32 = arith.constant 0 : i32
    %c0_i32_0 = arith.constant 0 : i32
    %c0_i32_1 = arith.constant 0 : i32
    return %c0_i32, %c0_i32_0 : i32, i32
  }
}

</mosaic_0001>

<llo_original>
// kernel: tpu_custom_call.1
$region0: #{tpu_custom_call.1}
  #allocation0 [shape = 'u32[]', space=smem, size = 0x4, offset = 0x4, fixed_abs, tag = 'smem constant byte address 0x4 - core index']
  #allocation1 [shape = 'u32[144,128]{1,0:T(1,128)}', space=vmem, size = 0x12000, scoped, tag = 'internal scratch']
  %s0 = inlined_call_operand.hbm [shape: f32[256,128], index: 0, kind: input, shape index: {}]
  %s1 = inlined_call_operand.hbm [shape: f32[256,256], index: 1, kind: input, shape index: {}]
  %s2 = inlined_call_operand.hbm [shape: f32[128,128], index: 2, kind: input, shape index: {}]
  %s3 = inlined_call_operand.vmem [shape: f32[1,128], index: 3, kind: input, shape index: {}]
  %s4 = inlined_call_operand.hbm [shape: f32[128,128], index: 4, kind: input, shape index: {}]
  %s5 = inlined_call_operand.vmem [shape: f32[1,128], index: 5, kind: input, shape index: {}]
  %s6 = inlined_call_operand.hbm [shape: f32[128,128], index: 6, kind: input, shape index: {}]
  %s7 = inlined_call_operand.vmem [shape: f32[1,128], index: 7, kind: input, shape index: {}]
  %s8 = inlined_call_operand.hbm [shape: f32[256,128], index: 8, kind: output, shape index: {}]
  %s9 = sld [smem:[#allocation0]]
  $region62: #{tpu_custom_call.1} parent=0
    _
  %s11 = ssub.s32 1, %s9
  %s12 = scalar_select 0, %s11, %s9
  $region1: #{tpu_custom_call.1} parent=0
    #allocation2 [shape = 'u8[131072]{0}', space=vmem, size = 0x20000, scoped, tag = 'input window, operand 0, single buffered']
    #allocation3 [shape = 's32[1]{0}', space=sflag, size = 0x4, scoped, tag = 'scoped memory for tpu_custom_call.1']
    #allocation4 [shape = 's32[1]{0}', space=sflag, size = 0x4, scoped, tag = 'scoped memory for tpu_custom_call.1']
    #allocation5 [shape = 'u8[262144]{0}', space=vmem, size = 0x40000, scoped, tag = 'input window, operand 1, single buffered']
    #allocation6 [shape = 's32[1]{0}', space=sflag, size = 0x4, scoped, tag = 'scoped memory for tpu_custom_call.1']
    #allocation7 [shape = 'u8[65536]{0}', space=vmem, size = 0x10000, scoped, tag = 'input window, operand 2, single buffered']
    #allocation8 [shape = 'u8[65536]{0}', space=vmem, size = 0x10000, scoped, tag = 'input window, operand 4, single buffered']
    #allocation9 [shape = 's32[1]{0}', space=sflag, size = 0x4, scoped, tag = 'scoped memory for tpu_custom_call.1']
    #allocation10 [shape = 'u8[65536]{0}', space=vmem, size = 0x10000, scoped, tag = 'input window, operand 6, single buffered']
    #allocation11 [shape = 'u8[131072]{0}', space=vmem, size = 0x20000, scoped, tag = 'output window, operand 0, single buffered']
    %13 = vsyncpa [#allocation3], 0
    %14 = vsyncpa [#allocation6], 0
    %15 = vsyncpa [#allocation9], 0
    %16 = vsyncpa [#allocation4], 0
    // Predicated region
    $region2: #{tpu_custom_call.1} parent=1 // pred_check
      _
    $region3: #{tpu_custom_call.1} parent=1 // pred_check_branch
      %18 = sbr.rel (0) target = $region5
    $region4: #{tpu_custom_call.1} parent=1 // pred_region
      %s20 = ssub.s32 4096, 4096
      %21 = vsyncadd [#allocation3], %s20
      %s22 = sshll.u32 [#allocation2], 4
      %s23 = int_to_ptr.vmem [resolvable:$true] %s22
      %28 = dma.hbm_to_vmem [thread:$0]  %s0, 4096, %s23, [#allocation3], 128, 128, 8
    $region5: #{tpu_custom_call.1} parent=1 // pred_fallthru
      _
    // Predicated region
    $region6: #{tpu_custom_call.1} parent=1 // pred_check
      _
    $region7: #{tpu_custom_call.1} parent=1 // pred_check_branch
      %30 = sbr.rel (0) target = $region9
    $region8: #{tpu_custom_call.1} parent=1 // pred_region
      %s32 = ssub.s32 8192, 8192
      %33 = vsyncadd [#allocation6], %s32
      %s34 = sshll.u32 [#allocation5], 4
      %s35 = int_to_ptr.vmem [resolvable:$true] %s34
      %40 = dma.hbm_to_vmem [thread:$0]  %s1, 8192, %s35, [#allocation6], 256, 256, 16
    $region9: #{tpu_custom_call.1} parent=1 // pred_fallthru
      _
    // Predicated region
    $region10: #{tpu_custom_call.1} parent=1 // pred_check
      _
    $region11: #{tpu_custom_call.1} parent=1 // pred_check_branch
      %42 = sbr.rel (0) target = $region13
    $region12: #{tpu_custom_call.1} parent=1 // pred_region
      %s44 = ssub.s32 2048, 2048
      %45 = vsyncadd [#allocation6], %s44
      %s46 = sshll.u32 [#allocation7], 4
      %s47 = int_to_ptr.vmem [resolvable:$true] %s46
      %52 = dma.hbm_to_vmem [thread:$0]  %s2, 2048, %s47, [#allocation6], 128, 128, 8
    $region13: #{tpu_custom_call.1} parent=1 // pred_fallthru
      _
    // Predicated region
    $region14: #{tpu_custom_call.1} parent=1 // pred_check
      _
    $region15: #{tpu_custom_call.1} parent=1 // pred_check_branch
      %54 = sbr.rel (0) target = $region17
    $region16: #{tpu_custom_call.1} parent=1 // pred_region
      _
    $region17: #{tpu_custom_call.1} parent=1 // pred_fallthru
      _
    // Predicated region
    $region18: #{tpu_custom_call.1} parent=1 // pred_check
      _
    $region19: #{tpu_custom_call.1} parent=1 // pred_check_branch
      %56 = sbr.rel (0) target = $region21
    $region20: #{tpu_custom_call.1} parent=1 // pred_region
      %s58 = ssub.s32 2048, 2048
      %59 = vsyncadd [#allocation9], %s58
      %s60 = sshll.u32 [#allocation8], 4
      %s61 = int_to_ptr.vmem [resolvable:$true] %s60
      %66 = dma.hbm_to_vmem [thread:$0]  %s4, 2048, %s61, [#allocation9], 128, 128, 8
    $region21: #{tpu_custom_call.1} parent=1 // pred_fallthru
      _
    // Predicated region
    $region22: #{tpu_custom_call.1} parent=1 // pred_check
      _
    $region23: #{tpu_custom_call.1} parent=1 // pred_check_branch
      %68 = sbr.rel (0) target = $region25
    $region24: #{tpu_custom_call.1} parent=1 // pred_region
      _
    $region25: #{tpu_custom_call.1} parent=1 // pred_fallthru
      _
    // Predicated region
    $region26: #{tpu_custom_call.1} parent=1 // pred_check
      _
    $region27: #{tpu_custom_call.1} parent=1 // pred_check_branch
      %70 = sbr.rel (0) target = $region29
    $region28: #{tpu_custom_call.1} parent=1 // pred_region
      %s72 = ssub.s32 2048, 2048
      %73 = vsyncadd [#allocation9], %s72
      %s74 = sshll.u32 [#allocation10], 4
      %s75 = int_to_ptr.vmem [resolvable:$true] %s74
      %80 = dma.hbm_to_vmem [thread:$0]  %s6, 2048, %s75, [#allocation9], 128, 128, 8
    $region29: #{tpu_custom_call.1} parent=1 // pred_fallthru
      _
    // Predicated region
    $region30: #{tpu_custom_call.1} parent=1 // pred_check
      _
    $region31: #{tpu_custom_call.1} parent=1 // pred_check_branch
      %82 = sbr.rel (0) target = $region33
    $region32: #{tpu_custom_call.1} parent=1 // pred_region
      _
    $region33: #{tpu_custom_call.1} parent=1 // pred_fallthru
      _
    // Predicated region
    $region34: #{tpu_custom_call.1} parent=1 // pred_check
      _
    $region35: #{tpu_custom_call.1} parent=1 // pred_check_branch
      %84 = sbr.rel (0) target = $region37
    $region36: #{tpu_custom_call.1} parent=1 // pred_region
      %85 = dma.done [#allocation3], 4096
    $region37: #{tpu_custom_call.1} parent=1 // pred_fallthru
      _
    // Predicated region
    $region38: #{tpu_custom_call.1} parent=1 // pred_check
      _
    $region39: #{tpu_custom_call.1} parent=1 // pred_check_branch
      %87 = sbr.rel (0) target = $region41
    $region40: #{tpu_custom_call.1} parent=1 // pred_region
      %88 = dma.done [#allocation6], 8192
    $region41: #{tpu_custom_call.1} parent=1 // pred_fallthru
      _
    // Predicated region
    $region42: #{tpu_custom_call.1} parent=1 // pred_check
      _
    $region43: #{tpu_custom_call.1} parent=1 // pred_check_branch
      %90 = sbr.rel (0) target = $region45
    $region44: #{tpu_custom_call.1} parent=1 // pred_region
      %91 = dma.done [#allocation6], 2048
    $region45: #{tpu_custom_call.1} parent=1 // pred_fallthru
      _
    // Predicated region
    $region46: #{tpu_custom_call.1} parent=1 // pred_check
      _
    $region47: #{tpu_custom_call.1} parent=1 // pred_check_branch
      %93 = sbr.rel (0) target = $region49
    $region48: #{tpu_custom_call.1} parent=1 // pred_region
      %94 = dma.done [#allocation9], 2048
    $region49: #{tpu_custom_call.1} parent=1 // pred_fallthru
      _
    // Predicated region
    $region50: #{tpu_custom_call.1} parent=1 // pred_check
      _
    $region51: #{tpu_custom_call.1} parent=1 // pred_check_branch
      %96 = sbr.rel (0) target = $region53
    $region52: #{tpu_custom_call.1} parent=1 // pred_region
      %97 = dma.done [#allocation9], 2048
    $region53: #{tpu_custom_call.1} parent=1 // pred_fallthru
      _
    %v98 = vld [vmem:[#allocation5] sm:$0xff]
    %v99 = vld [vmem:[#allocation5 + $0x8] sm:$0xff]
    %v100 = vld [vmem:[#allocation5 + $0x10] sm:$0xff]
    %v101 = vld [vmem:[#allocation5 + $0x18] sm:$0xff]
    %v102 = vld [vmem:[#allocation5 + $0x20] sm:$0xff]
    %v103 = vld [vmem:[#allocation5 + $0x28] sm:$0xff]
    %v104 = vld [vmem:[#allocation5 + $0x30] sm:$0xff]
    %v105 = vld [vmem:[#allocation5 + $0x38] sm:$0xff]
    %v106 = vld [vmem:[#allocation5 + $0x40] sm:$0xff]
    %v107 = vld [vmem:[#allocation5 + $0x48] sm:$0xff]
    %v108 = vld [vmem:[#allocation5 + $0x50] sm:$0xff]
    %v109 = vld [vmem:[#allocation5 + $0x58] sm:$0xff]
    %v110 = vld [vmem:[#allocation5 + $0x60] sm:$0xff]
    %v111 = vld [vmem:[#allocation5 + $0x68] sm:$0xff]
    %v112 = vld [vmem:[#allocation5 + $0x70] sm:$0xff]
    %v113 = vld [vmem:[#allocation5 + $0x78] sm:$0xff]
    %v114 = vld [vmem:[#allocation5 + $0x80] sm:$0xff]
    %v115 = vld [vmem:[#allocation5 + $0x88] sm:$0xff]
    %v116 = vld [vmem:[#allocation5 + $0x90] sm:$0xff]
    %v117 = vld [vmem:[#allocation5 + $0x98] sm:$0xff]
    %v118 = vld [vmem:[#allocation5 + $0xa0] sm:$0xff]
    %v119 = vld [vmem:[#allocation5 + $0xa8] sm:$0xff]
    %v120 = vld [vmem:[#allocation5 + $0xb0] sm:$0xff]
    %v121 = vld [vmem:[#allocation5 + $0xb8] sm:$0xff]
    %v122 = vld [vmem:[#allocation5 + $0xc0] sm:$0xff]
    %v123 = vld [vmem:[#allocation5 + $0xc8] sm:$0xff]
    %v124 = vld [vmem:[#allocation5 + $0xd0] sm:$0xff]
    %v125 = vld [vmem:[#allocation5 + $0xd8] sm:$0xff]
    %v126 = vld [vmem:[#allocation5 + $0xe0] sm:$0xff]
    %v127 = vld [vmem:[#allocation5 + $0xe8] sm:$0xff]
    %v128 = vld [vmem:[#allocation5 + $0xf0] sm:$0xff]
    %v129 = vld [vmem:[#allocation5 + $0xf8] sm:$0xff]
    %v130 = vld [vmem:[#allocation5 + $0x100] sm:$0xff]
    %v131 = vld [vmem:[#allocation5 + $0x108] sm:$0xff]
    %v132 = vld [vmem:[#allocation5 + $0x110] sm:$0xff]
    %v133 = vld [vmem:[#allocation5 + $0x118] sm:$0xff]
    %v134 = vld [vmem:[#allocation5 + $0x120] sm:$0xff]
    %v135 = vld [vmem:[#allocation5 + $0x128] sm:$0xff]
    %v136 = vld [vmem:[#allocation5 + $0x130] sm:$0xff]
    %v137 = vld [vmem:[#allocation5 + $0x138] sm:$0xff]
    %v138 = vld [vmem:[#allocation5 + $0x140] sm:$0xff]
    %v139 = vld [vmem:[#allocation5 + $0x148] sm:$0xff]
    %v140 = vld [vmem:[#allocation5 + $0x150] sm:$0xff]
    %v141 = vld [vmem:[#allocation5 + $0x158] sm:$0xff]
    %v142 = vld [vmem:[#allocation5 + $0x160] sm:$0xff]
    %v143 = vld [vmem:[#allocation5 + $0x168] sm:$0xff]
    %v144 = vld [vmem:[#allocation5 + $0x170] sm:$0xff]
    %v145 = vld [vmem:[#allocation5 + $0x178] sm:$0xff]
    %v146 = vld [vmem:[#allocation5 + $0x180] sm:$0xff]
    %v147 = vld [vmem:[#allocation5 + $0x188] sm:$0xff]
    %v148 = vld [vmem:[#allocation5 + $0x190] sm:$0xff]
    %v149 = vld [vmem:[#allocation5 + $0x198] sm:$0xff]
    %v150 = vld [vmem:[#allocation5 + $0x1a0] sm:$0xff]
    %v151 = vld [vmem:[#allocation5 + $0x1a8] sm:$0xff]
    %v152 = vld [vmem:[#allocation5 + $0x1b0] sm:$0xff]
    %v153 = vld [vmem:[#allocation5 + $0x1b8] sm:$0xff]
    %v154 = vld [vmem:[#allocation5 + $0x1c0] sm:$0xff]
    %v155 = vld [vmem:[#allocation5 + $0x1c8] sm:$0xff]
    %v156 = vld [vmem:[#allocation5 + $0x1d0] sm:$0xff]
    %v157 = vld [vmem:[#allocation5 + $0x1d8] sm:$0xff]
    %v158 = vld [vmem:[#allocation5 + $0x1e0] sm:$0xff]
    %v159 = vld [vmem:[#allocation5 + $0x1e8] sm:$0xff]
    %v160 = vld [vmem:[#allocation5 + $0x1f0] sm:$0xff]
    %v161 = vld [vmem:[#allocation5 + $0x1f8] sm:$0xff]
    %v162 = vld [vmem:[#allocation2] sm:$0xff]
    %v163 = vld [vmem:[#allocation2 + $0x8] sm:$0xff]
    %v164 = vld [vmem:[#allocation2 + $0x10] sm:$0xff]
    %v165 = vld [vmem:[#allocation2 + $0x18] sm:$0xff]
    %v166 = vld [vmem:[#allocation2 + $0x20] sm:$0xff]
    %v167 = vld [vmem:[#allocation2 + $0x28] sm:$0xff]
    %v168 = vld [vmem:[#allocation2 + $0x30] sm:$0xff]
    %v169 = vld [vmem:[#allocation2 + $0x38] sm:$0xff]
    %v170 = vld [vmem:[#allocation2 + $0x40] sm:$0xff]
    %v171 = vld [vmem:[#allocation2 + $0x48] sm:$0xff]
    %v172 = vld [vmem:[#allocation2 + $0x50] sm:$0xff]
    %v173 = vld [vmem:[#allocation2 + $0x58] sm:$0xff]
    %v174 = vld [vmem:[#allocation2 + $0x60] sm:$0xff]
    %v175 = vld [vmem:[#allocation2 + $0x68] sm:$0xff]
    %v176 = vld [vmem:[#allocation2 + $0x70] sm:$0xff]
    %v177 = vld [vmem:[#allocation2 + $0x78] sm:$0xff]
    %v178 = vld [vmem:[#allocation2 + $0x80] sm:$0xff]
    %v179 = vld [vmem:[#allocation2 + $0x88] sm:$0xff]
    %v180 = vld [vmem:[#allocation2 + $0x90] sm:$0xff]
    %v181 = vld [vmem:[#allocation2 + $0x98] sm:$0xff]
    %v182 = vld [vmem:[#allocation2 + $0xa0] sm:$0xff]
    %v183 = vld [vmem:[#allocation2 + $0xa8] sm:$0xff]
    %v184 = vld [vmem:[#allocation2 + $0xb0] sm:$0xff]
    %v185 = vld [vmem:[#allocation2 + $0xb8] sm:$0xff]
    %v186 = vld [vmem:[#allocation2 + $0xc0] sm:$0xff]
    %v187 = vld [vmem:[#allocation2 + $0xc8] sm:$0xff]
    %v188 = vld [vmem:[#allocation2 + $0xd0] sm:$0xff]
    %v189 = vld [vmem:[#allocation2 + $0xd8] sm:$0xff]
    %v190 = vld [vmem:[#allocation2 + $0xe0] sm:$0xff]
    %v191 = vld [vmem:[#allocation2 + $0xe8] sm:$0xff]
    %v192 = vld [vmem:[#allocation2 + $0xf0] sm:$0xff]
    %v193 = vld [vmem:[#allocation2 + $0xf8] sm:$0xff]
    %v194 = vld [vmem:[#allocation7] sm:$0xff]
    %v195 = vld [vmem:[#allocation7 + $0x8] sm:$0xff]
    %v196 = vld [vmem:[#allocation7 + $0x10] sm:$0xff]
    %v197 = vld [vmem:[#allocation7 + $0x18] sm:$0xff]
    %v198 = vld [vmem:[#allocation7 + $0x20] sm:$0xff]
    %v199 = vld [vmem:[#allocation7 + $0x28] sm:$0xff]
    %v200 = vld [vmem:[#allocation7 + $0x30] sm:$0xff]
    %v201 = vld [vmem:[#allocation7 + $0x38] sm:$0xff]
    %v202 = vld [vmem:[#allocation7 + $0x40] sm:$0xff]
    %v203 = vld [vmem:[#allocation7 + $0x48] sm:$0xff]
    %v204 = vld [vmem:[#allocation7 + $0x50] sm:$0xff]
    %v205 = vld [vmem:[#allocation7 + $0x58] sm:$0xff]
    %v206 = vld [vmem:[#allocation7 + $0x60] sm:$0xff]
    %v207 = vld [vmem:[#allocation7 + $0x68] sm:$0xff]
    %v208 = vld [vmem:[#allocation7 + $0x70] sm:$0xff]
    %v209 = vld [vmem:[#allocation7 + $0x78] sm:$0xff]
    %v210 = vld [vmem:[%s3] sm:$0x1]
    %v212 = vlaneseq
    %v213 = vshrl.u32 %v212, 7
    %v214 = vsub.s32 0, %v213
    %v215 = vrot.slane %v210, %v214
    %217 = vmatprep.subr.mxu0 0.0
    %218 = vmatpush1.msra.mxu0 %v209
    %219 = vmatprep.subr.mxu0 0.0
    %220 = vmatpush1.msra.mxu0 %v208
    %221 = vmatprep.subr.mxu0 0.0
    %222 = vmatpush1.msra.mxu0 %v207
    %223 = vmatprep.subr.mxu0 0.0
    %224 = vmatpush1.msra.mxu0 %v206
    %225 = vmatprep.subr.mxu0 0.0
    %226 = vmatpush1.msra.mxu0 %v205
    %227 = vmatprep.subr.mxu0 0.0
    %228 = vmatpush1.msra.mxu0 %v204
    %229 = vmatprep.subr.mxu0 0.0
    %230 = vmatpush1.msra.mxu0 %v203
    %231 = vmatprep.subr.mxu0 0.0
    %232 = vmatpush1.msra.mxu0 %v202
    %233 = vmatprep.subr.mxu0 0.0
    %234 = vmatpush1.msra.mxu0 %v201
    %235 = vmatprep.subr.mxu0 0.0
    %236 = vmatpush1.msra.mxu0 %v200
    %237 = vmatprep.subr.mxu0 0.0
    %238 = vmatpush1.msra.mxu0 %v199
    %239 = vmatprep.subr.mxu0 0.0
    %240 = vmatpush1.msra.mxu0 %v198
    %241 = vmatprep.subr.mxu0 0.0
    %242 = vmatpush1.msra.mxu0 %v197
    %243 = vmatprep.subr.mxu0 0.0
    %244 = vmatpush1.msra.mxu0 %v196
    %245 = vmatprep.subr.mxu0 0.0
    %246 = vmatpush1.msra.mxu0 %v195
    %247 = vmatprep.subr.mxu0 0.0
    %248 = vmatpush1.msra.mxu0 %v194
    %249 = vmatprep.subr.mxu0 0.0
    %250 = vmatpush2.msra.mxu0 0.0
    %251 = vmatprep.subr.mxu0 0.0
    %252 = vmatpush2.msra.mxu0 0.0
    %253 = vmatprep.subr.mxu0 0.0
    %254 = vmatpush2.msra.mxu0 0.0
    %255 = vmatprep.subr.mxu0 0.0
    %256 = vmatpush2.msra.mxu0 0.0
    %257 = vmatprep.subr.mxu0 0.0
    %258 = vmatpush2.msra.mxu0 0.0
    %259 = vmatprep.subr.mxu0 0.0
    %260 = vmatpush2.msra.mxu0 0.0
    %261 = vmatprep.subr.mxu0 0.0
    %262 = vmatpush2.msra.mxu0 0.0
    %263 = vmatprep.subr.mxu0 0.0
    %264 = vmatpush2.msra.mxu0 0.0
    %265 = vmatprep.subr.mxu0 0.0
    %266 = vmatpush2.msra.mxu0 0.0
    %267 = vmatprep.subr.mxu0 0.0
    %268 = vmatpush2.msra.mxu0 0.0
    %269 = vmatprep.subr.mxu0 0.0
    %270 = vmatpush2.msra.mxu0 0.0
    %271 = vmatprep.subr.mxu0 0.0
    %272 = vmatpush2.msra.mxu0 0.0
    %273 = vmatprep.subr.mxu0 0.0
    %274 = vmatpush2.msra.mxu0 0.0
    %275 = vmatprep.subr.mxu0 0.0
    %276 = vmatpush2.msra.mxu0 0.0
    %277 = vmatprep.subr.mxu0 0.0
    %278 = vmatpush2.msra.mxu0 0.0
    %279 = vmatprep.subr.mxu0 0.0
    %280 = vmatpush2.msra.mxu0 0.0
    %281 = vmatprep.mubr.f32.mxu0 0.0
    %282 = vmatmul.mubr.f32.gmra.mxu0 %v162
    %v283 = vpop.f32.mrf.mxu0
    %v284 = vadd.f32 %v215, %v283
    %v285 = vpop.f32.mrf.mxu0
    %286 = vmatprep.mubr.f32.mxu0 0.0
    %287 = vmatmul.mubr.f32.gmra.mxu0 %v163
    %v288 = vpop.f32.mrf.mxu0
    %v289 = vadd.f32 %v215, %v288
    %v290 = vpop.f32.mrf.mxu0
    %291 = vmatprep.mubr.f32.mxu0 0.0
    %292 = vmatmul.mubr.f32.gmra.mxu0 %v164
    %v293 = vpop.f32.mrf.mxu0
    %v294 = vadd.f32 %v215, %v293
    %v295 = vpop.f32.mrf.mxu0
    %296 = vmatprep.mubr.f32.mxu0 0.0
    %297 = vmatmul.mubr.f32.gmra.mxu0 %v165
    %v298 = vpop.f32.mrf.mxu0
    %v299 = vadd.f32 %v215, %v298
    %v300 = vpop.f32.mrf.mxu0
    %301 = vmatprep.mubr.f32.mxu0 0.0
    %302 = vmatmul.mubr.f32.gmra.mxu0 %v166
    %v303 = vpop.f32.mrf.mxu0
    %v304 = vadd.f32 %v215, %v303
    %v305 = vpop.f32.mrf.mxu0
    %306 = vmatprep.mubr.f32.mxu0 0.0
    %307 = vmatmul.mubr.f32.gmra.mxu0 %v167
    %v308 = vpop.f32.mrf.mxu0
    %v309 = vadd.f32 %v215, %v308
    %v310 = vpop.f32.mrf.mxu0
    %311 = vmatprep.mubr.f32.mxu0 0.0
    %312 = vmatmul.mubr.f32.gmra.mxu0 %v168
    %v313 = vpop.f32.mrf.mxu0
    %v314 = vadd.f32 %v215, %v313
    %v315 = vpop.f32.mrf.mxu0
    %316 = vmatprep.mubr.f32.mxu0 0.0
    %317 = vmatmul.mubr.f32.gmra.mxu0 %v169
    %v318 = vpop.f32.mrf.mxu0
    %v319 = vadd.f32 %v215, %v318
    %v320 = vpop.f32.mrf.mxu0
    %321 = vmatprep.mubr.f32.mxu0 0.0
    %322 = vmatmul.mubr.f32.gmra.mxu0 %v170
    %v323 = vpop.f32.mrf.mxu0
    %v324 = vadd.f32 %v215, %v323
    %v325 = vpop.f32.mrf.mxu0
    %326 = vmatprep.mubr.f32.mxu0 0.0
    %327 = vmatmul.mubr.f32.gmra.mxu0 %v171
    %v328 = vpop.f32.mrf.mxu0
    %v329 = vadd.f32 %v215, %v328
    %v330 = vpop.f32.mrf.mxu0
    %331 = vmatprep.mubr.f32.mxu0 0.0
    %332 = vmatmul.mubr.f32.gmra.mxu0 %v172
    %v333 = vpop.f32.mrf.mxu0
    %v334 = vadd.f32 %v215, %v333
    %v335 = vpop.f32.mrf.mxu0
    %336 = vmatprep.mubr.f32.mxu0 0.0
    %337 = vmatmul.mubr.f32.gmra.mxu0 %v173
    %v338 = vpop.f32.mrf.mxu0
    %v339 = vadd.f32 %v215, %v338
    %v340 = vpop.f32.mrf.mxu0
    %341 = vmatprep.mubr.f32.mxu0 0.0
    %342 = vmatmul.mubr.f32.gmra.mxu0 %v174
    %v343 = vpop.f32.mrf.mxu0
    %v344 = vadd.f32 %v215, %v343
    %v345 = vpop.f32.mrf.mxu0
    %346 = vmatprep.mubr.f32.mxu0 0.0
    %347 = vmatmul.mubr.f32.gmra.mxu0 %v175
    %v348 = vpop.f32.mrf.mxu0
    %v349 = vadd.f32 %v215, %v348
    %v350 = vpop.f32.mrf.mxu0
    %351 = vmatprep.mubr.f32.mxu0 0.0
    %352 = vmatmul.mubr.f32.gmra.mxu0 %v176
    %v353 = vpop.f32.mrf.mxu0
    %v354 = vadd.f32 %v215, %v353
    %v355 = vpop.f32.mrf.mxu0
    %356 = vmatprep.mubr.f32.mxu0 0.0
    %357 = vmatmul.mubr.f32.gmra.mxu0 %v177
    %v358 = vpop.f32.mrf.mxu0
    %v359 = vadd.f32 %v215, %v358
    %v360 = vpop.f32.mrf.mxu0
    %361 = vmatprep.mubr.f32.mxu0 0.0
    %362 = vmatmul.mubr.f32.gmra.mxu0 %v178
    %v363 = vpop.f32.mrf.mxu0
    %v364 = vadd.f32 %v215, %v363
    %v365 = vpop.f32.mrf.mxu0
    %366 = vmatprep.mubr.f32.mxu0 0.0
    %367 = vmatmul.mubr.f32.gmra.mxu0 %v179
    %v368 = vpop.f32.mrf.mxu0
    %v369 = vadd.f32 %v215, %v368
    %v370 = vpop.f32.mrf.mxu0
    %371 = vmatprep.mubr.f32.mxu0 0.0
    %372 = vmatmul.mubr.f32.gmra.mxu0 %v180
    %v373 = vpop.f32.mrf.mxu0
    %v374 = vadd.f32 %v215, %v373
    %v375 = vpop.f32.mrf.mxu0
    %376 = vmatprep.mubr.f32.mxu0 0.0
    %377 = vmatmul.mubr.f32.gmra.mxu0 %v181
    %v378 = vpop.f32.mrf.mxu0
    %v379 = vadd.f32 %v215, %v378
    %v380 = vpop.f32.mrf.mxu0
    %381 = vmatprep.mubr.f32.mxu0 0.0
    %382 = vmatmul.mubr.f32.gmra.mxu0 %v182
    %v383 = vpop.f32.mrf.mxu0
    %v384 = vadd.f32 %v215, %v383
    %v385 = vpop.f32.mrf.mxu0
    %386 = vmatprep.mubr.f32.mxu0 0.0
    %387 = vmatmul.mubr.f32.gmra.mxu0 %v183
    %v388 = vpop.f32.mrf.mxu0
    %v389 = vadd.f32 %v215, %v388
    %v390 = vpop.f32.mrf.mxu0
    %391 = vmatprep.mubr.f32.mxu0 0.0
    %392 = vmatmul.mubr.f32.gmra.mxu0 %v184
    %v393 = vpop.f32.mrf.mxu0
    %v394 = vadd.f32 %v215, %v393
    %v395 = vpop.f32.mrf.mxu0
    %396 = vmatprep.mubr.f32.mxu0 0.0
    %397 = vmatmul.mubr.f32.gmra.mxu0 %v185
    %v398 = vpop.f32.mrf.mxu0
    %v399 = vadd.f32 %v215, %v398
    %v400 = vpop.f32.mrf.mxu0
    %401 = vmatprep.mubr.f32.mxu0 0.0
    %402 = vmatmul.mubr.f32.gmra.mxu0 %v186
    %v403 = vpop.f32.mrf.mxu0
    %v404 = vadd.f32 %v215, %v403
    %v405 = vpop.f32.mrf.mxu0
    %406 = vmatprep.mubr.f32.mxu0 0.0
    %407 = vmatmul.mubr.f32.gmra.mxu0 %v187
    %v408 = vpop.f32.mrf.mxu0
    %v409 = vadd.f32 %v215, %v408
    %v410 = vpop.f32.mrf.mxu0
    %411 = vmatprep.mubr.f32.mxu0 0.0
    %412 = vmatmul.mubr.f32.gmra.mxu0 %v188
    %v413 = vpop.f32.mrf.mxu0
    %v414 = vadd.f32 %v215, %v413
    %v415 = vpop.f32.mrf.mxu0
    %416 = vmatprep.mubr.f32.mxu0 0.0
    %417 = vmatmul.mubr.f32.gmra.mxu0 %v189
    %v418 = vpop.f32.mrf.mxu0
    %v419 = vadd.f32 %v215, %v418
    %v420 = vpop.f32.mrf.mxu0
    %421 = vmatprep.mubr.f32.mxu0 0.0
    %422 = vmatmul.mubr.f32.gmra.mxu0 %v190
    %v423 = vpop.f32.mrf.mxu0
    %v424 = vadd.f32 %v215, %v423
    %v425 = vpop.f32.mrf.mxu0
    %426 = vmatprep.mubr.f32.mxu0 0.0
    %427 = vmatmul.mubr.f32.gmra.mxu0 %v191
    %v428 = vpop.f32.mrf.mxu0
    %v429 = vadd.f32 %v215, %v428
    %v430 = vpop.f32.mrf.mxu0
    %431 = vmatprep.mubr.f32.mxu0 0.0
    %432 = vmatmul.mubr.f32.gmra.mxu0 %v192
    %v433 = vpop.f32.mrf.mxu0
    %v434 = vadd.f32 %v215, %v433
    %v435 = vpop.f32.mrf.mxu0
    %436 = vmatprep.mubr.f32.mxu0 0.0
    %437 = vmatmul.mubr.f32.gmra.mxu0 %v193
    %v438 = vpop.f32.mrf.mxu0
    %v439 = vadd.f32 %v215, %v438
    %v440 = vpop.f32.mrf.mxu0
    %441 = vdwg.mxu0
    %442 = vmatprep.subr.mxu0 0.0
    %443 = vmatpush1.msra.mxu0 %v359
    %444 = vmatprep.subr.mxu0 0.0
    %445 = vmatpush1.msra.mxu0 %v354
    %446 = vmatprep.subr.mxu0 0.0
    %447 = vmatpush1.msra.mxu0 %v349
    %448 = vmatprep.subr.mxu0 0.0
    %449 = vmatpush1.msra.mxu0 %v344
    %450 = vmatprep.subr.mxu0 0.0
    %451 = vmatpush1.msra.mxu0 %v339
    %452 = vmatprep.subr.mxu0 0.0
    %453 = vmatpush1.msra.mxu0 %v334
    %454 = vmatprep.subr.mxu0 0.0
    %455 = vmatpush1.msra.mxu0 %v329
    %456 = vmatprep.subr.mxu0 0.0
    %457 = vmatpush1.msra.mxu0 %v324
    %458 = vmatprep.subr.mxu0 0.0
    %459 = vmatpush1.msra.mxu0 %v319
    %460 = vmatprep.subr.mxu0 0.0
    %461 = vmatpush1.msra.mxu0 %v314
    %462 = vmatprep.subr.mxu0 0.0
    %463 = vmatpush1.msra.mxu0 %v309
    %464 = vmatprep.subr.mxu0 0.0
    %465 = vmatpush1.msra.mxu0 %v304
    %466 = vmatprep.subr.mxu0 0.0
    %467 = vmatpush1.msra.mxu0 %v299
    %468 = vmatprep.subr.mxu0 0.0
    %469 = vmatpush1.msra.mxu0 %v294
    %470 = vmatprep.subr.mxu0 0.0
    %471 = vmatpush1.msra.mxu0 %v289
    %472 = vmatprep.subr.mxu0 0.0
    %473 = vmatpush1.msra.mxu0 %v284
    %474 = vmatprep.subr.mxu0 0.0
    %475 = vmatpush2.msra.mxu0 %v439
    %476 = vmatprep.subr.mxu0 0.0
    %477 = vmatpush2.msra.mxu0 %v434
    %478 = vmatprep.subr.mxu0 0.0
    %479 = vmatpush2.msra.mxu0 %v429
    %480 = vmatprep.subr.mxu0 0.0
    %481 = vmatpush2.msra.mxu0 %v424
    %482 = vmatprep.subr.mxu0 0.0
    %483 = vmatpush2.msra.mxu0 %v419
    %484 = vmatprep.subr.mxu0 0.0
    %485 = vmatpush2.msra.mxu0 %v414
    %486 = vmatprep.subr.mxu0 0.0
    %487 = vmatpush2.msra.mxu0 %v409
    %488 = vmatprep.subr.mxu0 0.0
    %489 = vmatpush2.msra.mxu0 %v404
    %490 = vmatprep.subr.mxu0 0.0
    %491 = vmatpush2.msra.mxu0 %v399
    %492 = vmatprep.subr.mxu0 0.0
    %493 = vmatpush2.msra.mxu0 %v394
    %494 = vmatprep.subr.mxu0 0.0
    %495 = vmatpush2.msra.mxu0 %v389
    %496 = vmatprep.subr.mxu0 0.0
    %497 = vmatpush2.msra.mxu0 %v384
    %498 = vmatprep.subr.mxu0 0.0
    %499 = vmatpush2.msra.mxu0 %v379
    %500 = vmatprep.subr.mxu0 0.0
    %501 = vmatpush2.msra.mxu0 %v374
    %502 = vmatprep.subr.mxu0 0.0
    %503 = vmatpush2.msra.mxu0 %v369
    %504 = vmatprep.subr.mxu0 0.0
    %505 = vmatpush2.msra.mxu0 %v364
    %506 = vmatprep.mubr.f32.mxu0 %v99
    %507 = vmatmul.mubr.f32.gmra.mxu0 %v98
    %v508 = vpop.f32.mrf.mxu0
    %v509 = vadd.f32 0.0, %v508
    %v510 = vpop.f32.mrf.mxu0
    %511 = vmatprep.mubr.f32.mxu0 %v101
    %512 = vmatmul.mubr.f32.gmra.mxu0 %v100
    %v513 = vpop.f32.mrf.mxu0
    %v514 = vadd.f32 0.0, %v513
    %v515 = vpop.f32.mrf.mxu0
    %516 = vmatprep.mubr.f32.mxu0 %v103
    %517 = vmatmul.mubr.f32.gmra.mxu0 %v102
    %v518 = vpop.f32.mrf.mxu0
    %v519 = vadd.f32 0.0, %v518
    %v520 = vpop.f32.mrf.mxu0
    %521 = vmatprep.mubr.f32.mxu0 %v105
    %522 = vmatmul.mubr.f32.gmra.mxu0 %v104
    %v523 = vpop.f32.mrf.mxu0
    %v524 = vadd.f32 0.0, %v523
    %v525 = vpop.f32.mrf.mxu0
    %526 = vmatprep.mubr.f32.mxu0 %v107
    %527 = vmatmul.mubr.f32.gmra.mxu0 %v106
    %v528 = vpop.f32.mrf.mxu0
    %v529 = vadd.f32 0.0, %v528
    %v530 = vpop.f32.mrf.mxu0
    %531 = vmatprep.mubr.f32.mxu0 %v109
    %532 = vmatmul.mubr.f32.gmra.mxu0 %v108
    %v533 = vpop.f32.mrf.mxu0
    %v534 = vadd.f32 0.0, %v533
    %v535 = vpop.f32.mrf.mxu0
    %536 = vmatprep.mubr.f32.mxu0 %v111
    %537 = vmatmul.mubr.f32.gmra.mxu0 %v110
    %v538 = vpop.f32.mrf.mxu0
    %v539 = vadd.f32 0.0, %v538
    %v540 = vpop.f32.mrf.mxu0
    %541 = vmatprep.mubr.f32.mxu0 %v113
    %542 = vmatmul.mubr.f32.gmra.mxu0 %v112
    %v543 = vpop.f32.mrf.mxu0
    %v544 = vadd.f32 0.0, %v543
    %v545 = vpop.f32.mrf.mxu0
    %546 = vmatprep.mubr.f32.mxu0 %v115
    %547 = vmatmul.mubr.f32.gmra.mxu0 %v114
    %v548 = vpop.f32.mrf.mxu0
    %v549 = vadd.f32 0.0, %v548
    %v550 = vpop.f32.mrf.mxu0
    %551 = vmatprep.mubr.f32.mxu0 %v117
    %552 = vmatmul.mubr.f32.gmra.mxu0 %v116
    %v553 = vpop.f32.mrf.mxu0
    %v554 = vadd.f32 0.0, %v553
    %v555 = vpop.f32.mrf.mxu0
    %556 = vmatprep.mubr.f32.mxu0 %v119
    %557 = vmatmul.mubr.f32.gmra.mxu0 %v118
    %v558 = vpop.f32.mrf.mxu0
    %v559 = vadd.f32 0.0, %v558
    %v560 = vpop.f32.mrf.mxu0
    %561 = vmatprep.mubr.f32.mxu0 %v121
    %562 = vmatmul.mubr.f32.gmra.mxu0 %v120
    %v563 = vpop.f32.mrf.mxu0
    %v564 = vadd.f32 0.0, %v563
    %v565 = vpop.f32.mrf.mxu0
    %566 = vmatprep.mubr.f32.mxu0 %v123
    %567 = vmatmul.mubr.f32.gmra.mxu0 %v122
    %v568 = vpop.f32.mrf.mxu0
    %v569 = vadd.f32 0.0, %v568
    %v570 = vpop.f32.mrf.mxu0
    %571 = vmatprep.mubr.f32.mxu0 %v125
    %572 = vmatmul.mubr.f32.gmra.mxu0 %v124
    %v573 = vpop.f32.mrf.mxu0
    %v574 = vadd.f32 0.0, %v573
    %v575 = vpop.f32.mrf.mxu0
    %576 = vmatprep.mubr.f32.mxu0 %v127
    %577 = vmatmul.mubr.f32.gmra.mxu0 %v126
    %v578 = vpop.f32.mrf.mxu0
    %v579 = vadd.f32 0.0, %v578
    %v580 = vpop.f32.mrf.mxu0
    %581 = vmatprep.mubr.f32.mxu0 %v129
    %582 = vmatmul.mubr.f32.gmra.mxu0 %v128
    %v583 = vpop.f32.mrf.mxu0
    %v584 = vadd.f32 0.0, %v583
    %v585 = vpop.f32.mrf.mxu0
    %586 = vmatprep.mubr.f32.mxu0 %v131
    %587 = vmatmul.mubr.f32.gmra.mxu0 %v130
    %v588 = vpop.f32.mrf.mxu0
    %v589 = vadd.f32 0.0, %v588
    %v590 = vpop.f32.mrf.mxu0
    %591 = vmatprep.mubr.f32.mxu0 %v133
    %592 = vmatmul.mubr.f32.gmra.mxu0 %v132
    %v593 = vpop.f32.mrf.mxu0
    %v594 = vadd.f32 0.0, %v593
    %v595 = vpop.f32.mrf.mxu0
    %596 = vmatprep.mubr.f32.mxu0 %v135
    %597 = vmatmul.mubr.f32.gmra.mxu0 %v134
    %v598 = vpop.f32.mrf.mxu0
    %v599 = vadd.f32 0.0, %v598
    %v600 = vpop.f32.mrf.mxu0
    %601 = vmatprep.mubr.f32.mxu0 %v137
    %602 = vmatmul.mubr.f32.gmra.mxu0 %v136
    %v603 = vpop.f32.mrf.mxu0
    %v604 = vadd.f32 0.0, %v603
    %v605 = vpop.f32.mrf.mxu0
    %606 = vmatprep.mubr.f32.mxu0 %v139
    %607 = vmatmul.mubr.f32.gmra.mxu0 %v138
    %v608 = vpop.f32.mrf.mxu0
    %v609 = vadd.f32 0.0, %v608
    %v610 = vpop.f32.mrf.mxu0
    %611 = vmatprep.mubr.f32.mxu0 %v141
    %612 = vmatmul.mubr.f32.gmra.mxu0 %v140
    %v613 = vpop.f32.mrf.mxu0
    %v614 = vadd.f32 0.0, %v613
    %v615 = vpop.f32.mrf.mxu0
    %616 = vmatprep.mubr.f32.mxu0 %v143
    %617 = vmatmul.mubr.f32.gmra.mxu0 %v142
    %v618 = vpop.f32.mrf.mxu0
    %v619 = vadd.f32 0.0, %v618
    %v620 = vpop.f32.mrf.mxu0
    %621 = vmatprep.mubr.f32.mxu0 %v145
    %622 = vmatmul.mubr.f32.gmra.mxu0 %v144
    %v623 = vpop.f32.mrf.mxu0
    %v624 = vadd.f32 0.0, %v623
    %v625 = vpop.f32.mrf.mxu0
    %626 = vmatprep.mubr.f32.mxu0 %v147
    %627 = vmatmul.mubr.f32.gmra.mxu0 %v146
    %v628 = vpop.f32.mrf.mxu0
    %v629 = vadd.f32 0.0, %v628
    %v630 = vpop.f32.mrf.mxu0
    %631 = vmatprep.mubr.f32.mxu0 %v149
    %632 = vmatmul.mubr.f32.gmra.mxu0 %v148
    %v633 = vpop.f32.mrf.mxu0
    %v634 = vadd.f32 0.0, %v633
    %v635 = vpop.f32.mrf.mxu0
    %636 = vmatprep.mubr.f32.mxu0 %v151
    %637 = vmatmul.mubr.f32.gmra.mxu0 %v150
    %v638 = vpop.f32.mrf.mxu0
    %v639 = vadd.f32 0.0, %v638
    %v640 = vpop.f32.mrf.mxu0
    %641 = vmatprep.mubr.f32.mxu0 %v153
    %642 = vmatmul.mubr.f32.gmra.mxu0 %v152
    %v643 = vpop.f32.mrf.mxu0
    %v644 = vadd.f32 0.0, %v643
    %v645 = vpop.f32.mrf.mxu0
    %646 = vmatprep.mubr.f32.mxu0 %v155
    %647 = vmatmul.mubr.f32.gmra.mxu0 %v154
    %v648 = vpop.f32.mrf.mxu0
    %v649 = vadd.f32 0.0, %v648
    %v650 = vpop.f32.mrf.mxu0
    %651 = vmatprep.mubr.f32.mxu0 %v157
    %652 = vmatmul.mubr.f32.gmra.mxu0 %v156
    %v653 = vpop.f32.mrf.mxu0
    %v654 = vadd.f32 0.0, %v653
    %v655 = vpop.f32.mrf.mxu0
    %656 = vmatprep.mubr.f32.mxu0 %v159
    %657 = vmatmul.mubr.f32.gmra.mxu0 %v158
    %v658 = vpop.f32.mrf.mxu0
    %v659 = vadd.f32 0.0, %v658
    %v660 = vpop.f32.mrf.mxu0
    %661 = vmatprep.mubr.f32.mxu0 %v161
    %662 = vmatmul.mubr.f32.gmra.mxu0 %v160
    %v663 = vpop.f32.mrf.mxu0
    %v664 = vadd.f32 0.0, %v663
    %v665 = vpop.f32.mrf.mxu0
    %666 = vdwg.mxu0
    %v667 = vmax.f32 %v509, 0.0
    %v668 = vmax.f32 %v514, 0.0
    %v669 = vmax.f32 %v519, 0.0
    %v670 = vmax.f32 %v524, 0.0
    %v671 = vmax.f32 %v529, 0.0
    %v672 = vmax.f32 %v534, 0.0
    %v673 = vmax.f32 %v539, 0.0
    %v674 = vmax.f32 %v544, 0.0
    %v675 = vmax.f32 %v549, 0.0
    %v676 = vmax.f32 %v554, 0.0
    %v677 = vmax.f32 %v559, 0.0
    %v678 = vmax.f32 %v564, 0.0
    %v679 = vmax.f32 %v569, 0.0
    %v680 = vmax.f32 %v574, 0.0
    %v681 = vmax.f32 %v579, 0.0
    %v682 = vmax.f32 %v584, 0.0
    %v683 = vmax.f32 %v589, 0.0
    %v684 = vmax.f32 %v594, 0.0
    %v685 = vmax.f32 %v599, 0.0
    %v686 = vmax.f32 %v604, 0.0
    %v687 = vmax.f32 %v609, 0.0
    %v688 = vmax.f32 %v614, 0.0
    %v689 = vmax.f32 %v619, 0.0
    %v690 = vmax.f32 %v624, 0.0
    %v691 = vmax.f32 %v629, 0.0
    %v692 = vmax.f32 %v634, 0.0
    %v693 = vmax.f32 %v639, 0.0
    %v694 = vmax.f32 %v644, 0.0
    %v695 = vmax.f32 %v649, 0.0
    %v696 = vmax.f32 %v654, 0.0
    %v697 = vmax.f32 %v659, 0.0
    %v698 = vmax.f32 %v664, 0.0
    %v699 = vld [vmem:[#allocation8] sm:$0xff]
    %v700 = vld [vmem:[#allocation8 + $0x8] sm:$0xff]
    %v701 = vld [vmem:[#allocation8 + $0x10] sm:$0xff]
    %v702 = vld [vmem:[#allocation8 + $0x18] sm:$0xff]
    %v703 = vld [vmem:[#allocation8 + $0x20] sm:$0xff]
    %v704 = vld [vmem:[#allocation8 + $0x28] sm:$0xff]
    %v705 = vld [vmem:[#allocation8 + $0x30] sm:$0xff]
    %v706 = vld [vmem:[#allocation8 + $0x38] sm:$0xff]
    %v707 = vld [vmem:[#allocation8 + $0x40] sm:$0xff]
    %v708 = vld [vmem:[#allocation8 + $0x48] sm:$0xff]
    %v709 = vld [vmem:[#allocation8 + $0x50] sm:$0xff]
    %v710 = vld [vmem:[#allocation8 + $0x58] sm:$0xff]
    %v711 = vld [vmem:[#allocation8 + $0x60] sm:$0xff]
    %v712 = vld [vmem:[#allocation8 + $0x68] sm:$0xff]
    %v713 = vld [vmem:[#allocation8 + $0x70] sm:$0xff]
    %v714 = vld [vmem:[#allocation8 + $0x78] sm:$0xff]
    %v715 = vld [vmem:[%s5] sm:$0x1]
    %v717 = vlaneseq
    %v718 = vshrl.u32 %v717, 7
    %v719 = vsub.s32 0, %v718
    %v720 = vrot.slane %v715, %v719
    %722 = vmatprep.subr.mxu0 0.0
    %723 = vmatpush1.msra.mxu0 %v714
    %724 = vmatprep.subr.mxu0 0.0
    %725 = vmatpush1.msra.mxu0 %v713
    %726 = vmatprep.subr.mxu0 0.0
    %727 = vmatpush1.msra.mxu0 %v712
    %728 = vmatprep.subr.mxu0 0.0
    %729 = vmatpush1.msra.mxu0 %v711
    %730 = vmatprep.subr.mxu0 0.0
    %731 = vmatpush1.msra.mxu0 %v710
    %732 = vmatprep.subr.mxu0 0.0
    %733 = vmatpush1.msra.mxu0 %v709
    %734 = vmatprep.subr.mxu0 0.0
    %735 = vmatpush1.msra.mxu0 %v708
    %736 = vmatprep.subr.mxu0 0.0
    %737 = vmatpush1.msra.mxu0 %v707
    %738 = vmatprep.subr.mxu0 0.0
    %739 = vmatpush1.msra.mxu0 %v706
    %740 = vmatprep.subr.mxu0 0.0
    %741 = vmatpush1.msra.mxu0 %v705
    %742 = vmatprep.subr.mxu0 0.0
    %743 = vmatpush1.msra.mxu0 %v704
    %744 = vmatprep.subr.mxu0 0.0
    %745 = vmatpush1.msra.mxu0 %v703
    %746 = vmatprep.subr.mxu0 0.0
    %747 = vmatpush1.msra.mxu0 %v702
    %748 = vmatprep.subr.mxu0 0.0
    %749 = vmatpush1.msra.mxu0 %v701
    %750 = vmatprep.subr.mxu0 0.0
    %751 = vmatpush1.msra.mxu0 %v700
    %752 = vmatprep.subr.mxu0 0.0
    %753 = vmatpush1.msra.mxu0 %v699
    %754 = vmatprep.subr.mxu0 0.0
    %755 = vmatpush2.msra.mxu0 0.0
    %756 = vmatprep.subr.mxu0 0.0
    %757 = vmatpush2.msra.mxu0 0.0
    %758 = vmatprep.subr.mxu0 0.0
    %759 = vmatpush2.msra.mxu0 0.0
    %760 = vmatprep.subr.mxu0 0.0
    %761 = vmatpush2.msra.mxu0 0.0
    %762 = vmatprep.subr.mxu0 0.0
    %763 = vmatpush2.msra.mxu0 0.0
    %764 = vmatprep.subr.mxu0 0.0
    %765 = vmatpush2.msra.mxu0 0.0
    %766 = vmatprep.subr.mxu0 0.0
    %767 = vmatpush2.msra.mxu0 0.0
    %768 = vmatprep.subr.mxu0 0.0
    %769 = vmatpush2.msra.mxu0 0.0
    %770 = vmatprep.subr.mxu0 0.0
    %771 = vmatpush2.msra.mxu0 0.0
    %772 = vmatprep.subr.mxu0 0.0
    %773 = vmatpush2.msra.mxu0 0.0
    %774 = vmatprep.subr.mxu0 0.0
    %775 = vmatpush2.msra.mxu0 0.0
    %776 = vmatprep.subr.mxu0 0.0
    %777 = vmatpush2.msra.mxu0 0.0
    %778 = vmatprep.subr.mxu0 0.0
    %779 = vmatpush2.msra.mxu0 0.0
    %780 = vmatprep.subr.mxu0 0.0
    %781 = vmatpush2.msra.mxu0 0.0
    %782 = vmatprep.subr.mxu0 0.0
    %783 = vmatpush2.msra.mxu0 0.0
    %784 = vmatprep.subr.mxu0 0.0
    %785 = vmatpush2.msra.mxu0 0.0
    %786 = vmatprep.mubr.f32.mxu0 0.0
    %787 = vmatmul.mubr.f32.gmra.mxu0 %v667
    %v788 = vpop.f32.mrf.mxu0
    %v789 = vadd.f32 %v720, %v788
    %v790 = vpop.f32.mrf.mxu0
    %791 = vmatprep.mubr.f32.mxu0 0.0
    %792 = vmatmul.mubr.f32.gmra.mxu0 %v668
    %v793 = vpop.f32.mrf.mxu0
    %v794 = vadd.f32 %v720, %v793
    %v795 = vpop.f32.mrf.mxu0
    %796 = vmatprep.mubr.f32.mxu0 0.0
    %797 = vmatmul.mubr.f32.gmra.mxu0 %v669
    %v798 = vpop.f32.mrf.mxu0
    %v799 = vadd.f32 %v720, %v798
    %v800 = vpop.f32.mrf.mxu0
    %801 = vmatprep.mubr.f32.mxu0 0.0
    %802 = vmatmul.mubr.f32.gmra.mxu0 %v670
    %v803 = vpop.f32.mrf.mxu0
    %v804 = vadd.f32 %v720, %v803
    %v805 = vpop.f32.mrf.mxu0
    %806 = vmatprep.mubr.f32.mxu0 0.0
    %807 = vmatmul.mubr.f32.gmra.mxu0 %v671
    %v808 = vpop.f32.mrf.mxu0
    %v809 = vadd.f32 %v720, %v808
    %v810 = vpop.f32.mrf.mxu0
    %811 = vmatprep.mubr.f32.mxu0 0.0
    %812 = vmatmul.mubr.f32.gmra.mxu0 %v672
    %v813 = vpop.f32.mrf.mxu0
    %v814 = vadd.f32 %v720, %v813
    %v815 = vpop.f32.mrf.mxu0
    %816 = vmatprep.mubr.f32.mxu0 0.0
    %817 = vmatmul.mubr.f32.gmra.mxu0 %v673
    %v818 = vpop.f32.mrf.mxu0
    %v819 = vadd.f32 %v720, %v818
    %v820 = vpop.f32.mrf.mxu0
    %821 = vmatprep.mubr.f32.mxu0 0.0
    %822 = vmatmul.mubr.f32.gmra.mxu0 %v674
    %v823 = vpop.f32.mrf.mxu0
    %v824 = vadd.f32 %v720, %v823
    %v825 = vpop.f32.mrf.mxu0
    %826 = vmatprep.mubr.f32.mxu0 0.0
    %827 = vmatmul.mubr.f32.gmra.mxu0 %v675
    %v828 = vpop.f32.mrf.mxu0
    %v829 = vadd.f32 %v720, %v828
    %v830 = vpop.f32.mrf.mxu0
    %831 = vmatprep.mubr.f32.mxu0 0.0
    %832 = vmatmul.mubr.f32.gmra.mxu0 %v676
    %v833 = vpop.f32.mrf.mxu0
    %v834 = vadd.f32 %v720, %v833
    %v835 = vpop.f32.mrf.mxu0
    %836 = vmatprep.mubr.f32.mxu0 0.0
    %837 = vmatmul.mubr.f32.gmra.mxu0 %v677
    %v838 = vpop.f32.mrf.mxu0
    %v839 = vadd.f32 %v720, %v838
    %v840 = vpop.f32.mrf.mxu0
    %841 = vmatprep.mubr.f32.mxu0 0.0
    %842 = vmatmul.mubr.f32.gmra.mxu0 %v678
    %v843 = vpop.f32.mrf.mxu0
    %v844 = vadd.f32 %v720, %v843
    %v845 = vpop.f32.mrf.mxu0
    %846 = vmatprep.mubr.f32.mxu0 0.0
    %847 = vmatmul.mubr.f32.gmra.mxu0 %v679
    %v848 = vpop.f32.mrf.mxu0
    %v849 = vadd.f32 %v720, %v848
    %v850 = vpop.f32.mrf.mxu0
    %851 = vmatprep.mubr.f32.mxu0 0.0
    %852 = vmatmul.mubr.f32.gmra.mxu0 %v680
    %v853 = vpop.f32.mrf.mxu0
    %v854 = vadd.f32 %v720, %v853
    %v855 = vpop.f32.mrf.mxu0
    %856 = vmatprep.mubr.f32.mxu0 0.0
    %857 = vmatmul.mubr.f32.gmra.mxu0 %v681
    %v858 = vpop.f32.mrf.mxu0
    %v859 = vadd.f32 %v720, %v858
    %v860 = vpop.f32.mrf.mxu0
    %861 = vmatprep.mubr.f32.mxu0 0.0
    %862 = vmatmul.mubr.f32.gmra.mxu0 %v682
    %v863 = vpop.f32.mrf.mxu0
    %v864 = vadd.f32 %v720, %v863
    %v865 = vpop.f32.mrf.mxu0
    %866 = vmatprep.mubr.f32.mxu0 0.0
    %867 = vmatmul.mubr.f32.gmra.mxu0 %v683
    %v868 = vpop.f32.mrf.mxu0
    %v869 = vadd.f32 %v720, %v868
    %v870 = vpop.f32.mrf.mxu0
    %871 = vmatprep.mubr.f32.mxu0 0.0
    %872 = vmatmul.mubr.f32.gmra.mxu0 %v684
    %v873 = vpop.f32.mrf.mxu0
    %v874 = vadd.f32 %v720, %v873
    %v875 = vpop.f32.mrf.mxu0
    %876 = vmatprep.mubr.f32.mxu0 0.0
    %877 = vmatmul.mubr.f32.gmra.mxu0 %v685
    %v878 = vpop.f32.mrf.mxu0
    %v879 = vadd.f32 %v720, %v878
    %v880 = vpop.f32.mrf.mxu0
    %881 = vmatprep.mubr.f32.mxu0 0.0
    %882 = vmatmul.mubr.f32.gmra.mxu0 %v686
    %v883 = vpop.f32.mrf.mxu0
    %v884 = vadd.f32 %v720, %v883
    %v885 = vpop.f32.mrf.mxu0
    %886 = vmatprep.mubr.f32.mxu0 0.0
    %887 = vmatmul.mubr.f32.gmra.mxu0 %v687
    %v888 = vpop.f32.mrf.mxu0
    %v889 = vadd.f32 %v720, %v888
    %v890 = vpop.f32.mrf.mxu0
    %891 = vmatprep.mubr.f32.mxu0 0.0
    %892 = vmatmul.mubr.f32.gmra.mxu0 %v688
    %v893 = vpop.f32.mrf.mxu0
    %v894 = vadd.f32 %v720, %v893
    %v895 = vpop.f32.mrf.mxu0
    %896 = vmatprep.mubr.f32.mxu0 0.0
    %897 = vmatmul.mubr.f32.gmra.mxu0 %v689
    %v898 = vpop.f32.mrf.mxu0
    %v899 = vadd.f32 %v720, %v898
    %v900 = vpop.f32.mrf.mxu0
    %901 = vmatprep.mubr.f32.mxu0 0.0
    %902 = vmatmul.mubr.f32.gmra.mxu0 %v690
    %v903 = vpop.f32.mrf.mxu0
    %v904 = vadd.f32 %v720, %v903
    %v905 = vpop.f32.mrf.mxu0
    %906 = vmatprep.mubr.f32.mxu0 0.0
    %907 = vmatmul.mubr.f32.gmra.mxu0 %v691
    %v908 = vpop.f32.mrf.mxu0
    %v909 = vadd.f32 %v720, %v908
    %v910 = vpop.f32.mrf.mxu0
    %911 = vmatprep.mubr.f32.mxu0 0.0
    %912 = vmatmul.mubr.f32.gmra.mxu0 %v692
    %v913 = vpop.f32.mrf.mxu0
    %v914 = vadd.f32 %v720, %v913
    %v915 = vpop.f32.mrf.mxu0
    %916 = vmatprep.mubr.f32.mxu0 0.0
    %917 = vmatmul.mubr.f32.gmra.mxu0 %v693
    %v918 = vpop.f32.mrf.mxu0
    %v919 = vadd.f32 %v720, %v918
    %v920 = vpop.f32.mrf.mxu0
    %921 = vmatprep.mubr.f32.mxu0 0.0
    %922 = vmatmul.mubr.f32.gmra.mxu0 %v694
    %v923 = vpop.f32.mrf.mxu0
    %v924 = vadd.f32 %v720, %v923
    %v925 = vpop.f32.mrf.mxu0
    %926 = vmatprep.mubr.f32.mxu0 0.0
    %927 = vmatmul.mubr.f32.gmra.mxu0 %v695
    %v928 = vpop.f32.mrf.mxu0
    %v929 = vadd.f32 %v720, %v928
    %v930 = vpop.f32.mrf.mxu0
    %931 = vmatprep.mubr.f32.mxu0 0.0
    %932 = vmatmul.mubr.f32.gmra.mxu0 %v696
    %v933 = vpop.f32.mrf.mxu0
    %v934 = vadd.f32 %v720, %v933
    %v935 = vpop.f32.mrf.mxu0
    %936 = vmatprep.mubr.f32.mxu0 0.0
    %937 = vmatmul.mubr.f32.gmra.mxu0 %v697
    %v938 = vpop.f32.mrf.mxu0
    %v939 = vadd.f32 %v720, %v938
    %v940 = vpop.f32.mrf.mxu0
    %941 = vmatprep.mubr.f32.mxu0 0.0
    %942 = vmatmul.mubr.f32.gmra.mxu0 %v698
    %v943 = vpop.f32.mrf.mxu0
    %v944 = vadd.f32 %v720, %v943
    %v945 = vpop.f32.mrf.mxu0
    %946 = vdwg.mxu0
    %947 = vmatprep.subr.mxu0 0.0
    %948 = vmatpush1.msra.mxu0 %v864
    %949 = vmatprep.subr.mxu0 0.0
    %950 = vmatpush1.msra.mxu0 %v859
    %951 = vmatprep.subr.mxu0 0.0
    %952 = vmatpush1.msra.mxu0 %v854
    %953 = vmatprep.subr.mxu0 0.0
    %954 = vmatpush1.msra.mxu0 %v849
    %955 = vmatprep.subr.mxu0 0.0
    %956 = vmatpush1.msra.mxu0 %v844
    %957 = vmatprep.subr.mxu0 0.0
    %958 = vmatpush1.msra.mxu0 %v839
    %959 = vmatprep.subr.mxu0 0.0
    %960 = vmatpush1.msra.mxu0 %v834
    %961 = vmatprep.subr.mxu0 0.0
    %962 = vmatpush1.msra.mxu0 %v829
    %963 = vmatprep.subr.mxu0 0.0
    %964 = vmatpush1.msra.mxu0 %v824
    %965 = vmatprep.subr.mxu0 0.0
    %966 = vmatpush1.msra.mxu0 %v819
    %967 = vmatprep.subr.mxu0 0.0
    %968 = vmatpush1.msra.mxu0 %v814
    %969 = vmatprep.subr.mxu0 0.0
    %970 = vmatpush1.msra.mxu0 %v809
    %971 = vmatprep.subr.mxu0 0.0
    %972 = vmatpush1.msra.mxu0 %v804
    %973 = vmatprep.subr.mxu0 0.0
    %974 = vmatpush1.msra.mxu0 %v799
    %975 = vmatprep.subr.mxu0 0.0
    %976 = vmatpush1.msra.mxu0 %v794
    %977 = vmatprep.subr.mxu0 0.0
    %978 = vmatpush1.msra.mxu0 %v789
    %979 = vmatprep.subr.mxu0 0.0
    %980 = vmatpush2.msra.mxu0 %v944
    %981 = vmatprep.subr.mxu0 0.0
    %982 = vmatpush2.msra.mxu0 %v939
    %983 = vmatprep.subr.mxu0 0.0
    %984 = vmatpush2.msra.mxu0 %v934
    %985 = vmatprep.subr.mxu0 0.0
    %986 = vmatpush2.msra.mxu0 %v929
    %987 = vmatprep.subr.mxu0 0.0
    %988 = vmatpush2.msra.mxu0 %v924
    %989 = vmatprep.subr.mxu0 0.0
    %990 = vmatpush2.msra.mxu0 %v919
    %991 = vmatprep.subr.mxu0 0.0
    %992 = vmatpush2.msra.mxu0 %v914
    %993 = vmatprep.subr.mxu0 0.0
    %994 = vmatpush2.msra.mxu0 %v909
    %995 = vmatprep.subr.mxu0 0.0
    %996 = vmatpush2.msra.mxu0 %v904
    %997 = vmatprep.subr.mxu0 0.0
    %998 = vmatpush2.msra.mxu0 %v899
    %999 = vmatprep.subr.mxu0 0.0
    %1000 = vmatpush2.msra.mxu0 %v894
    %1001 = vmatprep.subr.mxu0 0.0
    %1002 = vmatpush2.msra.mxu0 %v889
    %1003 = vmatprep.subr.mxu0 0.0
    %1004 = vmatpush2.msra.mxu0 %v884
    %1005 = vmatprep.subr.mxu0 0.0
    %1006 = vmatpush2.msra.mxu0 %v879
    %1007 = vmatprep.subr.mxu0 0.0
    %1008 = vmatpush2.msra.mxu0 %v874
    %1009 = vmatprep.subr.mxu0 0.0
    %1010 = vmatpush2.msra.mxu0 %v869
    %1011 = vmatprep.mubr.f32.mxu0 %v99
    %1012 = vmatmul.mubr.f32.gmra.mxu0 %v98
    %v1013 = vpop.f32.mrf.mxu0
    %v1014 = vadd.f32 0.0, %v1013
    %v1015 = vpop.f32.mrf.mxu0
    %1016 = vmatprep.mubr.f32.mxu0 %v101
    %1017 = vmatmul.mubr.f32.gmra.mxu0 %v100
    %v1018 = vpop.f32.mrf.mxu0
    %v1019 = vadd.f32 0.0, %v1018
    %v1020 = vpop.f32.mrf.mxu0
    %1021 = vmatprep.mubr.f32.mxu0 %v103
    %1022 = vmatmul.mubr.f32.gmra.mxu0 %v102
    %v1023 = vpop.f32.mrf.mxu0
    %v1024 = vadd.f32 0.0, %v1023
    %v1025 = vpop.f32.mrf.mxu0
    %1026 = vmatprep.mubr.f32.mxu0 %v105
    %1027 = vmatmul.mubr.f32.gmra.mxu0 %v104
    %v1028 = vpop.f32.mrf.mxu0
    %v1029 = vadd.f32 0.0, %v1028
    %v1030 = vpop.f32.mrf.mxu0
    %1031 = vmatprep.mubr.f32.mxu0 %v107
    %1032 = vmatmul.mubr.f32.gmra.mxu0 %v106
    %v1033 = vpop.f32.mrf.mxu0
    %v1034 = vadd.f32 0.0, %v1033
    %v1035 = vpop.f32.mrf.mxu0
    %1036 = vmatprep.mubr.f32.mxu0 %v109
    %1037 = vmatmul.mubr.f32.gmra.mxu0 %v108
    %v1038 = vpop.f32.mrf.mxu0
    %v1039 = vadd.f32 0.0, %v1038
    %v1040 = vpop.f32.mrf.mxu0
    %1041 = vmatprep.mubr.f32.mxu0 %v111
    %1042 = vmatmul.mubr.f32.gmra.mxu0 %v110
    %v1043 = vpop.f32.mrf.mxu0
    %v1044 = vadd.f32 0.0, %v1043
    %v1045 = vpop.f32.mrf.mxu0
    %1046 = vmatprep.mubr.f32.mxu0 %v113
    %1047 = vmatmul.mubr.f32.gmra.mxu0 %v112
    %v1048 = vpop.f32.mrf.mxu0
    %v1049 = vadd.f32 0.0, %v1048
    %v1050 = vpop.f32.mrf.mxu0
    %1051 = vmatprep.mubr.f32.mxu0 %v115
    %1052 = vmatmul.mubr.f32.gmra.mxu0 %v114
    %v1053 = vpop.f32.mrf.mxu0
    %v1054 = vadd.f32 0.0, %v1053
    %v1055 = vpop.f32.mrf.mxu0
    %1056 = vmatprep.mubr.f32.mxu0 %v117
    %1057 = vmatmul.mubr.f32.gmra.mxu0 %v116
    %v1058 = vpop.f32.mrf.mxu0
    %v1059 = vadd.f32 0.0, %v1058
    %v1060 = vpop.f32.mrf.mxu0
    %1061 = vmatprep.mubr.f32.mxu0 %v119
    %1062 = vmatmul.mubr.f32.gmra.mxu0 %v118
    %v1063 = vpop.f32.mrf.mxu0
    %v1064 = vadd.f32 0.0, %v1063
    %v1065 = vpop.f32.mrf.mxu0
    %1066 = vmatprep.mubr.f32.mxu0 %v121
    %1067 = vmatmul.mubr.f32.gmra.mxu0 %v120
    %v1068 = vpop.f32.mrf.mxu0
    %v1069 = vadd.f32 0.0, %v1068
    %v1070 = vpop.f32.mrf.mxu0
    %1071 = vmatprep.mubr.f32.mxu0 %v123
    %1072 = vmatmul.mubr.f32.gmra.mxu0 %v122
    %v1073 = vpop.f32.mrf.mxu0
    %v1074 = vadd.f32 0.0, %v1073
    %v1075 = vpop.f32.mrf.mxu0
    %1076 = vmatprep.mubr.f32.mxu0 %v125
    %1077 = vmatmul.mubr.f32.gmra.mxu0 %v124
    %v1078 = vpop.f32.mrf.mxu0
    %v1079 = vadd.f32 0.0, %v1078
    %v1080 = vpop.f32.mrf.mxu0
    %1081 = vmatprep.mubr.f32.mxu0 %v127
    %1082 = vmatmul.mubr.f32.gmra.mxu0 %v126
    %v1083 = vpop.f32.mrf.mxu0
    %v1084 = vadd.f32 0.0, %v1083
    %v1085 = vpop.f32.mrf.mxu0
    %1086 = vmatprep.mubr.f32.mxu0 %v129
    %1087 = vmatmul.mubr.f32.gmra.mxu0 %v128
    %v1088 = vpop.f32.mrf.mxu0
    %v1089 = vadd.f32 0.0, %v1088
    %v1090 = vpop.f32.mrf.mxu0
    %1091 = vmatprep.mubr.f32.mxu0 %v131
    %1092 = vmatmul.mubr.f32.gmra.mxu0 %v130
    %v1093 = vpop.f32.mrf.mxu0
    %v1094 = vadd.f32 0.0, %v1093
    %v1095 = vpop.f32.mrf.mxu0
    %1096 = vmatprep.mubr.f32.mxu0 %v133
    %1097 = vmatmul.mubr.f32.gmra.mxu0 %v132
    %v1098 = vpop.f32.mrf.mxu0
    %v1099 = vadd.f32 0.0, %v1098
    %v1100 = vpop.f32.mrf.mxu0
    %1101 = vmatprep.mubr.f32.mxu0 %v135
    %1102 = vmatmul.mubr.f32.gmra.mxu0 %v134
    %v1103 = vpop.f32.mrf.mxu0
    %v1104 = vadd.f32 0.0, %v1103
    %v1105 = vpop.f32.mrf.mxu0
    %1106 = vmatprep.mubr.f32.mxu0 %v137
    %1107 = vmatmul.mubr.f32.gmra.mxu0 %v136
    %v1108 = vpop.f32.mrf.mxu0
    %v1109 = vadd.f32 0.0, %v1108
    %v1110 = vpop.f32.mrf.mxu0
    %1111 = vmatprep.mubr.f32.mxu0 %v139
    %1112 = vmatmul.mubr.f32.gmra.mxu0 %v138
    %v1113 = vpop.f32.mrf.mxu0
    %v1114 = vadd.f32 0.0, %v1113
    %v1115 = vpop.f32.mrf.mxu0
    %1116 = vmatprep.mubr.f32.mxu0 %v141
    %1117 = vmatmul.mubr.f32.gmra.mxu0 %v140
    %v1118 = vpop.f32.mrf.mxu0
    %v1119 = vadd.f32 0.0, %v1118
    %v1120 = vpop.f32.mrf.mxu0
    %1121 = vmatprep.mubr.f32.mxu0 %v143
    %1122 = vmatmul.mubr.f32.gmra.mxu0 %v142
    %v1123 = vpop.f32.mrf.mxu0
    %v1124 = vadd.f32 0.0, %v1123
    %v1125 = vpop.f32.mrf.mxu0
    %1126 = vmatprep.mubr.f32.mxu0 %v145
    %1127 = vmatmul.mubr.f32.gmra.mxu0 %v144
    %v1128 = vpop.f32.mrf.mxu0
    %v1129 = vadd.f32 0.0, %v1128
    %v1130 = vpop.f32.mrf.mxu0
    %1131 = vmatprep.mubr.f32.mxu0 %v147
    %1132 = vmatmul.mubr.f32.gmra.mxu0 %v146
    %v1133 = vpop.f32.mrf.mxu0
    %v1134 = vadd.f32 0.0, %v1133
    %v1135 = vpop.f32.mrf.mxu0
    %1136 = vmatprep.mubr.f32.mxu0 %v149
    %1137 = vmatmul.mubr.f32.gmra.mxu0 %v148
    %v1138 = vpop.f32.mrf.mxu0
    %v1139 = vadd.f32 0.0, %v1138
    %v1140 = vpop.f32.mrf.mxu0
    %1141 = vmatprep.mubr.f32.mxu0 %v151
    %1142 = vmatmul.mubr.f32.gmra.mxu0 %v150
    %v1143 = vpop.f32.mrf.mxu0
    %v1144 = vadd.f32 0.0, %v1143
    %v1145 = vpop.f32.mrf.mxu0
    %1146 = vmatprep.mubr.f32.mxu0 %v153
    %1147 = vmatmul.mubr.f32.gmra.mxu0 %v152
    %v1148 = vpop.f32.mrf.mxu0
    %v1149 = vadd.f32 0.0, %v1148
    %v1150 = vpop.f32.mrf.mxu0
    %1151 = vmatprep.mubr.f32.mxu0 %v155
    %1152 = vmatmul.mubr.f32.gmra.mxu0 %v154
    %v1153 = vpop.f32.mrf.mxu0
    %v1154 = vadd.f32 0.0, %v1153
    %v1155 = vpop.f32.mrf.mxu0
    %1156 = vmatprep.mubr.f32.mxu0 %v157
    %1157 = vmatmul.mubr.f32.gmra.mxu0 %v156
    %v1158 = vpop.f32.mrf.mxu0
    %v1159 = vadd.f32 0.0, %v1158
    %v1160 = vpop.f32.mrf.mxu0
    %1161 = vmatprep.mubr.f32.mxu0 %v159
    %1162 = vmatmul.mubr.f32.gmra.mxu0 %v158
    %v1163 = vpop.f32.mrf.mxu0
    %v1164 = vadd.f32 0.0, %v1163
    %v1165 = vpop.f32.mrf.mxu0
    %1166 = vmatprep.mubr.f32.mxu0 %v161
    %1167 = vmatmul.mubr.f32.gmra.mxu0 %v160
    %v1168 = vpop.f32.mrf.mxu0
    %v1169 = vadd.f32 0.0, %v1168
    %v1170 = vpop.f32.mrf.mxu0
    %1171 = vdwg.mxu0
    %v1172 = vmax.f32 %v1014, 0.0
    %v1173 = vmax.f32 %v1019, 0.0
    %v1174 = vmax.f32 %v1024, 0.0
    %v1175 = vmax.f32 %v1029, 0.0
    %v1176 = vmax.f32 %v1034, 0.0
    %v1177 = vmax.f32 %v1039, 0.0
    %v1178 = vmax.f32 %v1044, 0.0
    %v1179 = vmax.f32 %v1049, 0.0
    %v1180 = vmax.f32 %v1054, 0.0
    %v1181 = vmax.f32 %v1059, 0.0
    %v1182 = vmax.f32 %v1064, 0.0
    %v1183 = vmax.f32 %v1069, 0.0
    %v1184 = vmax.f32 %v1074, 0.0
    %v1185 = vmax.f32 %v1079, 0.0
    %v1186 = vmax.f32 %v1084, 0.0
    %v1187 = vmax.f32 %v1089, 0.0
    %v1188 = vmax.f32 %v1094, 0.0
    %v1189 = vmax.f32 %v1099, 0.0
    %v1190 = vmax.f32 %v1104, 0.0
    %v1191 = vmax.f32 %v1109, 0.0
    %v1192 = vmax.f32 %v1114, 0.0
    %v1193 = vmax.f32 %v1119, 0.0
    %v1194 = vmax.f32 %v1124, 0.0
    %v1195 = vmax.f32 %v1129, 0.0
    %v1196 = vmax.f32 %v1134, 0.0
    %v1197 = vmax.f32 %v1139, 0.0
    %v1198 = vmax.f32 %v1144, 0.0
    %v1199 = vmax.f32 %v1149, 0.0
    %v1200 = vmax.f32 %v1154, 0.0
    %v1201 = vmax.f32 %v1159, 0.0
    %v1202 = vmax.f32 %v1164, 0.0
    %v1203 = vmax.f32 %v1169, 0.0
    %v1204 = vld [vmem:[#allocation10] sm:$0xff]
    %v1205 = vld [vmem:[#allocation10 + $0x8] sm:$0xff]
    %v1206 = vld [vmem:[#allocation10 + $0x10] sm:$0xff]
    %v1207 = vld [vmem:[#allocation10 + $0x18] sm:$0xff]
    %v1208 = vld [vmem:[#allocation10 + $0x20] sm:$0xff]
    %v1209 = vld [vmem:[#allocation10 + $0x28] sm:$0xff]
    %v1210 = vld [vmem:[#allocation10 + $0x30] sm:$0xff]
    %v1211 = vld [vmem:[#allocation10 + $0x38] sm:$0xff]
    %v1212 = vld [vmem:[#allocation10 + $0x40] sm:$0xff]
    %v1213 = vld [vmem:[#allocation10 + $0x48] sm:$0xff]
    %v1214 = vld [vmem:[#allocation10 + $0x50] sm:$0xff]
    %v1215 = vld [vmem:[#allocation10 + $0x58] sm:$0xff]
    %v1216 = vld [vmem:[#allocation10 + $0x60] sm:$0xff]
    %v1217 = vld [vmem:[#allocation10 + $0x68] sm:$0xff]
    %v1218 = vld [vmem:[#allocation10 + $0x70] sm:$0xff]
    %v1219 = vld [vmem:[#allocation10 + $0x78] sm:$0xff]
    %v1220 = vld [vmem:[%s7] sm:$0x1]
    %v1222 = vlaneseq
    %v1223 = vshrl.u32 %v1222, 7
    %v1224 = vsub.s32 0, %v1223
    %v1225 = vrot.slane %v1220, %v1224
    %1227 = vmatprep.subr.mxu0 0.0
    %1228 = vmatpush1.msra.mxu0 %v1219
    %1229 = vmatprep.subr.mxu0 0.0
    %1230 = vmatpush1.msra.mxu0 %v1218
    %1231 = vmatprep.subr.mxu0 0.0
    %1232 = vmatpush1.msra.mxu0 %v1217
    %1233 = vmatprep.subr.mxu0 0.0
    %1234 = vmatpush1.msra.mxu0 %v1216
    %1235 = vmatprep.subr.mxu0 0.0
    %1236 = vmatpush1.msra.mxu0 %v1215
    %1237 = vmatprep.subr.mxu0 0.0
    %1238 = vmatpush1.msra.mxu0 %v1214
    %1239 = vmatprep.subr.mxu0 0.0
    %1240 = vmatpush1.msra.mxu0 %v1213
    %1241 = vmatprep.subr.mxu0 0.0
    %1242 = vmatpush1.msra.mxu0 %v1212
    %1243 = vmatprep.subr.mxu0 0.0
    %1244 = vmatpush1.msra.mxu0 %v1211
    %1245 = vmatprep.subr.mxu0 0.0
    %1246 = vmatpush1.msra.mxu0 %v1210
    %1247 = vmatprep.subr.mxu0 0.0
    %1248 = vmatpush1.msra.mxu0 %v1209
    %1249 = vmatprep.subr.mxu0 0.0
    %1250 = vmatpush1.msra.mxu0 %v1208
    %1251 = vmatprep.subr.mxu0 0.0
    %1252 = vmatpush1.msra.mxu0 %v1207
    %1253 = vmatprep.subr.mxu0 0.0
    %1254 = vmatpush1.msra.mxu0 %v1206
    %1255 = vmatprep.subr.mxu0 0.0
    %1256 = vmatpush1.msra.mxu0 %v1205
    %1257 = vmatprep.subr.mxu0 0.0
    %1258 = vmatpush1.msra.mxu0 %v1204
    %1259 = vmatprep.subr.mxu0 0.0
    %1260 = vmatpush2.msra.mxu0 0.0
    %1261 = vmatprep.subr.mxu0 0.0
    %1262 = vmatpush2.msra.mxu0 0.0
    %1263 = vmatprep.subr.mxu0 0.0
    %1264 = vmatpush2.msra.mxu0 0.0
    %1265 = vmatprep.subr.mxu0 0.0
    %1266 = vmatpush2.msra.mxu0 0.0
    %1267 = vmatprep.subr.mxu0 0.0
    %1268 = vmatpush2.msra.mxu0 0.0
    %1269 = vmatprep.subr.mxu0 0.0
    %1270 = vmatpush2.msra.mxu0 0.0
    %1271 = vmatprep.subr.mxu0 0.0
    %1272 = vmatpush2.msra.mxu0 0.0
    %1273 = vmatprep.subr.mxu0 0.0
    %1274 = vmatpush2.msra.mxu0 0.0
    %1275 = vmatprep.subr.mxu0 0.0
    %1276 = vmatpush2.msra.mxu0 0.0
    %1277 = vmatprep.subr.mxu0 0.0
    %1278 = vmatpush2.msra.mxu0 0.0
    %1279 = vmatprep.subr.mxu0 0.0
    %1280 = vmatpush2.msra.mxu0 0.0
    %1281 = vmatprep.subr.mxu0 0.0
    %1282 = vmatpush2.msra.mxu0 0.0
    %1283 = vmatprep.subr.mxu0 0.0
    %1284 = vmatpush2.msra.mxu0 0.0
    %1285 = vmatprep.subr.mxu0 0.0
    %1286 = vmatpush2.msra.mxu0 0.0
    %1287 = vmatprep.subr.mxu0 0.0
    %1288 = vmatpush2.msra.mxu0 0.0
    %1289 = vmatprep.subr.mxu0 0.0
    %1290 = vmatpush2.msra.mxu0 0.0
    %1291 = vmatprep.mubr.f32.mxu0 0.0
    %1292 = vmatmul.mubr.f32.gmra.mxu0 %v1172
    %v1293 = vpop.f32.mrf.mxu0
    %v1294 = vadd.f32 %v1225, %v1293
    %v1295 = vpop.f32.mrf.mxu0
    %1296 = vmatprep.mubr.f32.mxu0 0.0
    %1297 = vmatmul.mubr.f32.gmra.mxu0 %v1173
    %v1298 = vpop.f32.mrf.mxu0
    %v1299 = vadd.f32 %v1225, %v1298
    %v1300 = vpop.f32.mrf.mxu0
    %1301 = vmatprep.mubr.f32.mxu0 0.0
    %1302 = vmatmul.mubr.f32.gmra.mxu0 %v1174
    %v1303 = vpop.f32.mrf.mxu0
    %v1304 = vadd.f32 %v1225, %v1303
    %v1305 = vpop.f32.mrf.mxu0
    %1306 = vmatprep.mubr.f32.mxu0 0.0
    %1307 = vmatmul.mubr.f32.gmra.mxu0 %v1175
    %v1308 = vpop.f32.mrf.mxu0
    %v1309 = vadd.f32 %v1225, %v1308
    %v1310 = vpop.f32.mrf.mxu0
    %1311 = vmatprep.mubr.f32.mxu0 0.0
    %1312 = vmatmul.mubr.f32.gmra.mxu0 %v1176
    %v1313 = vpop.f32.mrf.mxu0
    %v1314 = vadd.f32 %v1225, %v1313
    %v1315 = vpop.f32.mrf.mxu0
    %1316 = vmatprep.mubr.f32.mxu0 0.0
    %1317 = vmatmul.mubr.f32.gmra.mxu0 %v1177
    %v1318 = vpop.f32.mrf.mxu0
    %v1319 = vadd.f32 %v1225, %v1318
    %v1320 = vpop.f32.mrf.mxu0
    %1321 = vmatprep.mubr.f32.mxu0 0.0
    %1322 = vmatmul.mubr.f32.gmra.mxu0 %v1178
    %v1323 = vpop.f32.mrf.mxu0
    %v1324 = vadd.f32 %v1225, %v1323
    %v1325 = vpop.f32.mrf.mxu0
    %1326 = vmatprep.mubr.f32.mxu0 0.0
    %1327 = vmatmul.mubr.f32.gmra.mxu0 %v1179
    %v1328 = vpop.f32.mrf.mxu0
    %v1329 = vadd.f32 %v1225, %v1328
    %v1330 = vpop.f32.mrf.mxu0
    %1331 = vmatprep.mubr.f32.mxu0 0.0
    %1332 = vmatmul.mubr.f32.gmra.mxu0 %v1180
    %v1333 = vpop.f32.mrf.mxu0
    %v1334 = vadd.f32 %v1225, %v1333
    %v1335 = vpop.f32.mrf.mxu0
    %1336 = vmatprep.mubr.f32.mxu0 0.0
    %1337 = vmatmul.mubr.f32.gmra.mxu0 %v1181
    %v1338 = vpop.f32.mrf.mxu0
    %v1339 = vadd.f32 %v1225, %v1338
    %v1340 = vpop.f32.mrf.mxu0
    %1341 = vmatprep.mubr.f32.mxu0 0.0
    %1342 = vmatmul.mubr.f32.gmra.mxu0 %v1182
    %v1343 = vpop.f32.mrf.mxu0
    %v1344 = vadd.f32 %v1225, %v1343
    %v1345 = vpop.f32.mrf.mxu0
    %1346 = vmatprep.mubr.f32.mxu0 0.0
    %1347 = vmatmul.mubr.f32.gmra.mxu0 %v1183
    %v1348 = vpop.f32.mrf.mxu0
    %v1349 = vadd.f32 %v1225, %v1348
    %v1350 = vpop.f32.mrf.mxu0
    %1351 = vmatprep.mubr.f32.mxu0 0.0
    %1352 = vmatmul.mubr.f32.gmra.mxu0 %v1184
    %v1353 = vpop.f32.mrf.mxu0
    %v1354 = vadd.f32 %v1225, %v1353
    %v1355 = vpop.f32.mrf.mxu0
    %1356 = vmatprep.mubr.f32.mxu0 0.0
    %1357 = vmatmul.mubr.f32.gmra.mxu0 %v1185
    %v1358 = vpop.f32.mrf.mxu0
    %v1359 = vadd.f32 %v1225, %v1358
    %v1360 = vpop.f32.mrf.mxu0
    %1361 = vmatprep.mubr.f32.mxu0 0.0
    %1362 = vmatmul.mubr.f32.gmra.mxu0 %v1186
    %v1363 = vpop.f32.mrf.mxu0
    %v1364 = vadd.f32 %v1225, %v1363
    %v1365 = vpop.f32.mrf.mxu0
    %1366 = vmatprep.mubr.f32.mxu0 0.0
    %1367 = vmatmul.mubr.f32.gmra.mxu0 %v1187
    %v1368 = vpop.f32.mrf.mxu0
    %v1369 = vadd.f32 %v1225, %v1368
    %v1370 = vpop.f32.mrf.mxu0
    %1371 = vmatprep.mubr.f32.mxu0 0.0
    %1372 = vmatmul.mubr.f32.gmra.mxu0 %v1188
    %v1373 = vpop.f32.mrf.mxu0
    %v1374 = vadd.f32 %v1225, %v1373
    %v1375 = vpop.f32.mrf.mxu0
    %1376 = vmatprep.mubr.f32.mxu0 0.0
    %1377 = vmatmul.mubr.f32.gmra.mxu0 %v1189
    %v1378 = vpop.f32.mrf.mxu0
    %v1379 = vadd.f32 %v1225, %v1378
    %v1380 = vpop.f32.mrf.mxu0
    %1381 = vmatprep.mubr.f32.mxu0 0.0
    %1382 = vmatmul.mubr.f32.gmra.mxu0 %v1190
    %v1383 = vpop.f32.mrf.mxu0
    %v1384 = vadd.f32 %v1225, %v1383
    %v1385 = vpop.f32.mrf.mxu0
    %1386 = vmatprep.mubr.f32.mxu0 0.0
    %1387 = vmatmul.mubr.f32.gmra.mxu0 %v1191
    %v1388 = vpop.f32.mrf.mxu0
    %v1389 = vadd.f32 %v1225, %v1388
    %v1390 = vpop.f32.mrf.mxu0
    %1391 = vmatprep.mubr.f32.mxu0 0.0
    %1392 = vmatmul.mubr.f32.gmra.mxu0 %v1192
    %v1393 = vpop.f32.mrf.mxu0
    %v1394 = vadd.f32 %v1225, %v1393
    %v1395 = vpop.f32.mrf.mxu0
    %1396 = vmatprep.mubr.f32.mxu0 0.0
    %1397 = vmatmul.mubr.f32.gmra.mxu0 %v1193
    %v1398 = vpop.f32.mrf.mxu0
    %v1399 = vadd.f32 %v1225, %v1398
    %v1400 = vpop.f32.mrf.mxu0
    %1401 = vmatprep.mubr.f32.mxu0 0.0
    %1402 = vmatmul.mubr.f32.gmra.mxu0 %v1194
    %v1403 = vpop.f32.mrf.mxu0
    %v1404 = vadd.f32 %v1225, %v1403
    %v1405 = vpop.f32.mrf.mxu0
    %1406 = vmatprep.mubr.f32.mxu0 0.0
    %1407 = vmatmul.mubr.f32.gmra.mxu0 %v1195
    %v1408 = vpop.f32.mrf.mxu0
    %v1409 = vadd.f32 %v1225, %v1408
    %v1410 = vpop.f32.mrf.mxu0
    %1411 = vmatprep.mubr.f32.mxu0 0.0
    %1412 = vmatmul.mubr.f32.gmra.mxu0 %v1196
    %v1413 = vpop.f32.mrf.mxu0
    %v1414 = vadd.f32 %v1225, %v1413
    %v1415 = vpop.f32.mrf.mxu0
    %1416 = vmatprep.mubr.f32.mxu0 0.0
    %1417 = vmatmul.mubr.f32.gmra.mxu0 %v1197
    %v1418 = vpop.f32.mrf.mxu0
    %v1419 = vadd.f32 %v1225, %v1418
    %v1420 = vpop.f32.mrf.mxu0
    %1421 = vmatprep.mubr.f32.mxu0 0.0
    %1422 = vmatmul.mubr.f32.gmra.mxu0 %v1198
    %v1423 = vpop.f32.mrf.mxu0
    %v1424 = vadd.f32 %v1225, %v1423
    %v1425 = vpop.f32.mrf.mxu0
    %1426 = vmatprep.mubr.f32.mxu0 0.0
    %1427 = vmatmul.mubr.f32.gmra.mxu0 %v1199
    %v1428 = vpop.f32.mrf.mxu0
    %v1429 = vadd.f32 %v1225, %v1428
    %v1430 = vpop.f32.mrf.mxu0
    %1431 = vmatprep.mubr.f32.mxu0 0.0
    %1432 = vmatmul.mubr.f32.gmra.mxu0 %v1200
    %v1433 = vpop.f32.mrf.mxu0
    %v1434 = vadd.f32 %v1225, %v1433
    %v1435 = vpop.f32.mrf.mxu0
    %1436 = vmatprep.mubr.f32.mxu0 0.0
    %1437 = vmatmul.mubr.f32.gmra.mxu0 %v1201
    %v1438 = vpop.f32.mrf.mxu0
    %v1439 = vadd.f32 %v1225, %v1438
    %v1440 = vpop.f32.mrf.mxu0
    %1441 = vmatprep.mubr.f32.mxu0 0.0
    %1442 = vmatmul.mubr.f32.gmra.mxu0 %v1202
    %v1443 = vpop.f32.mrf.mxu0
    %v1444 = vadd.f32 %v1225, %v1443
    %v1445 = vpop.f32.mrf.mxu0
    %1446 = vmatprep.mubr.f32.mxu0 0.0
    %1447 = vmatmul.mubr.f32.gmra.mxu0 %v1203
    %v1448 = vpop.f32.mrf.mxu0
    %v1449 = vadd.f32 %v1225, %v1448
    %v1450 = vpop.f32.mrf.mxu0
    %1451 = vdwg.mxu0
    %1452 = vmatprep.subr.mxu0 0.0
    %1453 = vmatpush1.msra.mxu0 %v1369
    %1454 = vmatprep.subr.mxu0 0.0
    %1455 = vmatpush1.msra.mxu0 %v1364
    %1456 = vmatprep.subr.mxu0 0.0
    %1457 = vmatpush1.msra.mxu0 %v1359
    %1458 = vmatprep.subr.mxu0 0.0
    %1459 = vmatpush1.msra.mxu0 %v1354
    %1460 = vmatprep.subr.mxu0 0.0
    %1461 = vmatpush1.msra.mxu0 %v1349
    %1462 = vmatprep.subr.mxu0 0.0
    %1463 = vmatpush1.msra.mxu0 %v1344
    %1464 = vmatprep.subr.mxu0 0.0
    %1465 = vmatpush1.msra.mxu0 %v1339
    %1466 = vmatprep.subr.mxu0 0.0
    %1467 = vmatpush1.msra.mxu0 %v1334
    %1468 = vmatprep.subr.mxu0 0.0
    %1469 = vmatpush1.msra.mxu0 %v1329
    %1470 = vmatprep.subr.mxu0 0.0
    %1471 = vmatpush1.msra.mxu0 %v1324
    %1472 = vmatprep.subr.mxu0 0.0
    %1473 = vmatpush1.msra.mxu0 %v1319
    %1474 = vmatprep.subr.mxu0 0.0
    %1475 = vmatpush1.msra.mxu0 %v1314
    %1476 = vmatprep.subr.mxu0 0.0
    %1477 = vmatpush1.msra.mxu0 %v1309
    %1478 = vmatprep.subr.mxu0 0.0
    %1479 = vmatpush1.msra.mxu0 %v1304
    %1480 = vmatprep.subr.mxu0 0.0
    %1481 = vmatpush1.msra.mxu0 %v1299
    %1482 = vmatprep.subr.mxu0 0.0
    %1483 = vmatpush1.msra.mxu0 %v1294
    %1484 = vmatprep.subr.mxu0 0.0
    %1485 = vmatpush2.msra.mxu0 %v1449
    %1486 = vmatprep.subr.mxu0 0.0
    %1487 = vmatpush2.msra.mxu0 %v1444
    %1488 = vmatprep.subr.mxu0 0.0
    %1489 = vmatpush2.msra.mxu0 %v1439
    %1490 = vmatprep.subr.mxu0 0.0
    %1491 = vmatpush2.msra.mxu0 %v1434
    %1492 = vmatprep.subr.mxu0 0.0
    %1493 = vmatpush2.msra.mxu0 %v1429
    %1494 = vmatprep.subr.mxu0 0.0
    %1495 = vmatpush2.msra.mxu0 %v1424
    %1496 = vmatprep.subr.mxu0 0.0
    %1497 = vmatpush2.msra.mxu0 %v1419
    %1498 = vmatprep.subr.mxu0 0.0
    %1499 = vmatpush2.msra.mxu0 %v1414
    %1500 = vmatprep.subr.mxu0 0.0
    %1501 = vmatpush2.msra.mxu0 %v1409
    %1502 = vmatprep.subr.mxu0 0.0
    %1503 = vmatpush2.msra.mxu0 %v1404
    %1504 = vmatprep.subr.mxu0 0.0
    %1505 = vmatpush2.msra.mxu0 %v1399
    %1506 = vmatprep.subr.mxu0 0.0
    %1507 = vmatpush2.msra.mxu0 %v1394
    %1508 = vmatprep.subr.mxu0 0.0
    %1509 = vmatpush2.msra.mxu0 %v1389
    %1510 = vmatprep.subr.mxu0 0.0
    %1511 = vmatpush2.msra.mxu0 %v1384
    %1512 = vmatprep.subr.mxu0 0.0
    %1513 = vmatpush2.msra.mxu0 %v1379
    %1514 = vmatprep.subr.mxu0 0.0
    %1515 = vmatpush2.msra.mxu0 %v1374
    %1516 = vmatprep.mubr.f32.mxu0 %v99
    %1517 = vmatmul.mubr.f32.gmra.mxu0 %v98
    %v1518 = vpop.f32.mrf.mxu0
    %v1519 = vadd.f32 0.0, %v1518
    %v1520 = vpop.f32.mrf.mxu0
    %1521 = vmatprep.mubr.f32.mxu0 %v101
    %1522 = vmatmul.mubr.f32.gmra.mxu0 %v100
    %v1523 = vpop.f32.mrf.mxu0
    %v1524 = vadd.f32 0.0, %v1523
    %v1525 = vpop.f32.mrf.mxu0
    %1526 = vmatprep.mubr.f32.mxu0 %v103
    %1527 = vmatmul.mubr.f32.gmra.mxu0 %v102
    %v1528 = vpop.f32.mrf.mxu0
    %v1529 = vadd.f32 0.0, %v1528
    %v1530 = vpop.f32.mrf.mxu0
    %1531 = vmatprep.mubr.f32.mxu0 %v105
    %1532 = vmatmul.mubr.f32.gmra.mxu0 %v104
    %v1533 = vpop.f32.mrf.mxu0
    %v1534 = vadd.f32 0.0, %v1533
    %v1535 = vpop.f32.mrf.mxu0
    %1536 = vmatprep.mubr.f32.mxu0 %v107
    %1537 = vmatmul.mubr.f32.gmra.mxu0 %v106
    %v1538 = vpop.f32.mrf.mxu0
    %v1539 = vadd.f32 0.0, %v1538
    %v1540 = vpop.f32.mrf.mxu0
    %1541 = vmatprep.mubr.f32.mxu0 %v109
    %1542 = vmatmul.mubr.f32.gmra.mxu0 %v108
    %v1543 = vpop.f32.mrf.mxu0
    %v1544 = vadd.f32 0.0, %v1543
    %v1545 = vpop.f32.mrf.mxu0
    %1546 = vmatprep.mubr.f32.mxu0 %v111
    %1547 = vmatmul.mubr.f32.gmra.mxu0 %v110
    %v1548 = vpop.f32.mrf.mxu0
    %v1549 = vadd.f32 0.0, %v1548
    %v1550 = vpop.f32.mrf.mxu0
    %1551 = vmatprep.mubr.f32.mxu0 %v113
    %1552 = vmatmul.mubr.f32.gmra.mxu0 %v112
    %v1553 = vpop.f32.mrf.mxu0
    %v1554 = vadd.f32 0.0, %v1553
    %v1555 = vpop.f32.mrf.mxu0
    %1556 = vmatprep.mubr.f32.mxu0 %v115
    %1557 = vmatmul.mubr.f32.gmra.mxu0 %v114
    %v1558 = vpop.f32.mrf.mxu0
    %v1559 = vadd.f32 0.0, %v1558
    %v1560 = vpop.f32.mrf.mxu0
    %1561 = vmatprep.mubr.f32.mxu0 %v117
    %1562 = vmatmul.mubr.f32.gmra.mxu0 %v116
    %v1563 = vpop.f32.mrf.mxu0
    %v1564 = vadd.f32 0.0, %v1563
    %v1565 = vpop.f32.mrf.mxu0
    %1566 = vmatprep.mubr.f32.mxu0 %v119
    %1567 = vmatmul.mubr.f32.gmra.mxu0 %v118
    %v1568 = vpop.f32.mrf.mxu0
    %v1569 = vadd.f32 0.0, %v1568
    %v1570 = vpop.f32.mrf.mxu0
    %1571 = vmatprep.mubr.f32.mxu0 %v121
    %1572 = vmatmul.mubr.f32.gmra.mxu0 %v120
    %v1573 = vpop.f32.mrf.mxu0
    %v1574 = vadd.f32 0.0, %v1573
    %v1575 = vpop.f32.mrf.mxu0
    %1576 = vmatprep.mubr.f32.mxu0 %v123
    %1577 = vmatmul.mubr.f32.gmra.mxu0 %v122
    %v1578 = vpop.f32.mrf.mxu0
    %v1579 = vadd.f32 0.0, %v1578
    %v1580 = vpop.f32.mrf.mxu0
    %1581 = vmatprep.mubr.f32.mxu0 %v125
    %1582 = vmatmul.mubr.f32.gmra.mxu0 %v124
    %v1583 = vpop.f32.mrf.mxu0
    %v1584 = vadd.f32 0.0, %v1583
    %v1585 = vpop.f32.mrf.mxu0
    %1586 = vmatprep.mubr.f32.mxu0 %v127
    %1587 = vmatmul.mubr.f32.gmra.mxu0 %v126
    %v1588 = vpop.f32.mrf.mxu0
    %v1589 = vadd.f32 0.0, %v1588
    %v1590 = vpop.f32.mrf.mxu0
    %1591 = vmatprep.mubr.f32.mxu0 %v129
    %1592 = vmatmul.mubr.f32.gmra.mxu0 %v128
    %v1593 = vpop.f32.mrf.mxu0
    %v1594 = vadd.f32 0.0, %v1593
    %v1595 = vpop.f32.mrf.mxu0
    %1596 = vmatprep.mubr.f32.mxu0 %v131
    %1597 = vmatmul.mubr.f32.gmra.mxu0 %v130
    %v1598 = vpop.f32.mrf.mxu0
    %v1599 = vadd.f32 0.0, %v1598
    %v1600 = vpop.f32.mrf.mxu0
    %1601 = vmatprep.mubr.f32.mxu0 %v133
    %1602 = vmatmul.mubr.f32.gmra.mxu0 %v132
    %v1603 = vpop.f32.mrf.mxu0
    %v1604 = vadd.f32 0.0, %v1603
    %v1605 = vpop.f32.mrf.mxu0
    %1606 = vmatprep.mubr.f32.mxu0 %v135
    %1607 = vmatmul.mubr.f32.gmra.mxu0 %v134
    %v1608 = vpop.f32.mrf.mxu0
    %v1609 = vadd.f32 0.0, %v1608
    %v1610 = vpop.f32.mrf.mxu0
    %1611 = vmatprep.mubr.f32.mxu0 %v137
    %1612 = vmatmul.mubr.f32.gmra.mxu0 %v136
    %v1613 = vpop.f32.mrf.mxu0
    %v1614 = vadd.f32 0.0, %v1613
    %v1615 = vpop.f32.mrf.mxu0
    %1616 = vmatprep.mubr.f32.mxu0 %v139
    %1617 = vmatmul.mubr.f32.gmra.mxu0 %v138
    %v1618 = vpop.f32.mrf.mxu0
    %v1619 = vadd.f32 0.0, %v1618
    %v1620 = vpop.f32.mrf.mxu0
    %1621 = vmatprep.mubr.f32.mxu0 %v141
    %1622 = vmatmul.mubr.f32.gmra.mxu0 %v140
    %v1623 = vpop.f32.mrf.mxu0
    %v1624 = vadd.f32 0.0, %v1623
    %v1625 = vpop.f32.mrf.mxu0
    %1626 = vmatprep.mubr.f32.mxu0 %v143
    %1627 = vmatmul.mubr.f32.gmra.mxu0 %v142
    %v1628 = vpop.f32.mrf.mxu0
    %v1629 = vadd.f32 0.0, %v1628
    %v1630 = vpop.f32.mrf.mxu0
    %1631 = vmatprep.mubr.f32.mxu0 %v145
    %1632 = vmatmul.mubr.f32.gmra.mxu0 %v144
    %v1633 = vpop.f32.mrf.mxu0
    %v1634 = vadd.f32 0.0, %v1633
    %v1635 = vpop.f32.mrf.mxu0
    %1636 = vmatprep.mubr.f32.mxu0 %v147
    %1637 = vmatmul.mubr.f32.gmra.mxu0 %v146
    %v1638 = vpop.f32.mrf.mxu0
    %v1639 = vadd.f32 0.0, %v1638
    %v1640 = vpop.f32.mrf.mxu0
    %1641 = vmatprep.mubr.f32.mxu0 %v149
    %1642 = vmatmul.mubr.f32.gmra.mxu0 %v148
    %v1643 = vpop.f32.mrf.mxu0
    %v1644 = vadd.f32 0.0, %v1643
    %v1645 = vpop.f32.mrf.mxu0
    %1646 = vmatprep.mubr.f32.mxu0 %v151
    %1647 = vmatmul.mubr.f32.gmra.mxu0 %v150
    %v1648 = vpop.f32.mrf.mxu0
    %v1649 = vadd.f32 0.0, %v1648
    %v1650 = vpop.f32.mrf.mxu0
    %1651 = vmatprep.mubr.f32.mxu0 %v153
    %1652 = vmatmul.mubr.f32.gmra.mxu0 %v152
    %v1653 = vpop.f32.mrf.mxu0
    %v1654 = vadd.f32 0.0, %v1653
    %v1655 = vpop.f32.mrf.mxu0
    %1656 = vmatprep.mubr.f32.mxu0 %v155
    %1657 = vmatmul.mubr.f32.gmra.mxu0 %v154
    %v1658 = vpop.f32.mrf.mxu0
    %v1659 = vadd.f32 0.0, %v1658
    %v1660 = vpop.f32.mrf.mxu0
    %1661 = vmatprep.mubr.f32.mxu0 %v157
    %1662 = vmatmul.mubr.f32.gmra.mxu0 %v156
    %v1663 = vpop.f32.mrf.mxu0
    %v1664 = vadd.f32 0.0, %v1663
    %v1665 = vpop.f32.mrf.mxu0
    %1666 = vmatprep.mubr.f32.mxu0 %v159
    %1667 = vmatmul.mubr.f32.gmra.mxu0 %v158
    %v1668 = vpop.f32.mrf.mxu0
    %v1669 = vadd.f32 0.0, %v1668
    %v1670 = vpop.f32.mrf.mxu0
    %1671 = vmatprep.mubr.f32.mxu0 %v161
    %1672 = vmatmul.mubr.f32.gmra.mxu0 %v160
    %v1673 = vpop.f32.mrf.mxu0
    %v1674 = vadd.f32 0.0, %v1673
    %v1675 = vpop.f32.mrf.mxu0
    %1676 = vdwg.mxu0
    %1677 = vst [vmem:[#allocation11] sm:$0xff] %v1519
    %1678 = vst [vmem:[#allocation11 + $0x8] sm:$0xff] %v1524
    %1679 = vst [vmem:[#allocation11 + $0x10] sm:$0xff] %v1529
    %1680 = vst [vmem:[#allocation11 + $0x18] sm:$0xff] %v1534
    %1681 = vst [vmem:[#allocation11 + $0x20] sm:$0xff] %v1539
    %1682 = vst [vmem:[#allocation11 + $0x28] sm:$0xff] %v1544
    %1683 = vst [vmem:[#allocation11 + $0x30] sm:$0xff] %v1549
    %1684 = vst [vmem:[#allocation11 + $0x38] sm:$0xff] %v1554
    %1685 = vst [vmem:[#allocation11 + $0x40] sm:$0xff] %v1559
    %1686 = vst [vmem:[#allocation11 + $0x48] sm:$0xff] %v1564
    %1687 = vst [vmem:[#allocation11 + $0x50] sm:$0xff] %v1569
    %1688 = vst [vmem:[#allocation11 + $0x58] sm:$0xff] %v1574
    %1689 = vst [vmem:[#allocation11 + $0x60] sm:$0xff] %v1579
    %1690 = vst [vmem:[#allocation11 + $0x68] sm:$0xff] %v1584
    %1691 = vst [vmem:[#allocation11 + $0x70] sm:$0xff] %v1589
    %1692 = vst [vmem:[#allocation11 + $0x78] sm:$0xff] %v1594
    %1693 = vst [vmem:[#allocation11 + $0x80] sm:$0xff] %v1599
    %1694 = vst [vmem:[#allocation11 + $0x88] sm:$0xff] %v1604
    %1695 = vst [vmem:[#allocation11 + $0x90] sm:$0xff] %v1609
    %1696 = vst [vmem:[#allocation11 + $0x98] sm:$0xff] %v1614
    %1697 = vst [vmem:[#allocation11 + $0xa0] sm:$0xff] %v1619
    %1698 = vst [vmem:[#allocation11 + $0xa8] sm:$0xff] %v1624
    %1699 = vst [vmem:[#allocation11 + $0xb0] sm:$0xff] %v1629
    %1700 = vst [vmem:[#allocation11 + $0xb8] sm:$0xff] %v1634
    %1701 = vst [vmem:[#allocation11 + $0xc0] sm:$0xff] %v1639
    %1702 = vst [vmem:[#allocation11 + $0xc8] sm:$0xff] %v1644
    %1703 = vst [vmem:[#allocation11 + $0xd0] sm:$0xff] %v1649
    %1704 = vst [vmem:[#allocation11 + $0xd8] sm:$0xff] %v1654
    %1705 = vst [vmem:[#allocation11 + $0xe0] sm:$0xff] %v1659
    %1706 = vst [vmem:[#allocation11 + $0xe8] sm:$0xff] %v1664
    %1707 = vst [vmem:[#allocation11 + $0xf0] sm:$0xff] %v1669
    %1708 = vst [vmem:[#allocation11 + $0xf8] sm:$0xff] %v1674
    // Predicated region
    $region54: #{tpu_custom_call.1} parent=1 // pred_check
      _
    $region55: #{tpu_custom_call.1} parent=1 // pred_check_branch
      %1710 = sbr.rel (0) target = $region57
    $region56: #{tpu_custom_call.1} parent=1 // pred_region
      %s1712 = ssub.s32 4096, 4096
      %1713 = vsyncadd [#allocation4], %s1712
      %s1714 = sshll.u32 [#allocation11], 4
      %s1715 = int_to_ptr.vmem [resolvable:$true] %s1714
      %1720 = dma.vmem_to_hbm [thread:$0]  %s1715, 4096, %s8, [#allocation4], 128, 128, 8
    $region57: #{tpu_custom_call.1} parent=1 // pred_fallthru
      _
    // Predicated region
    $region58: #{tpu_custom_call.1} parent=1 // pred_check
      _
    $region59: #{tpu_custom_call.1} parent=1 // pred_check_branch
      %1722 = sbr.rel (0) target = $region61
    $region60: #{tpu_custom_call.1} parent=1 // pred_region
      %1723 = dma.done [#allocation4], 4096
    $region61: #{tpu_custom_call.1} parent=1 // pred_fallthru
      _
    %1724 = vsyncpa [#allocation3], 1
    %1725 = vsyncpa [#allocation6], 1
    %1726 = vsyncpa [#allocation9], 1
    %1727 = vsyncpa [#allocation4], 1

</llo_original>
